<compile_context>
chip_gen: v5e
topology: v5e:2x2
jax: 0.10.0
libtpu: 0.0.40
codegen_flags: <defaults>
</compile_context>

<pallas_src>
import functools

import jax
import jax.numpy as jnp
from jax.experimental import pallas as pl
from jax.experimental.pallas import tpu as pltpu


def _encoder_kernel(view_idx_ref,   # SMEM scalar prefetch, (R_pad,) int32
                    x_ref,          # (Rblk*B, in_dim) f32  VMEM (this block's rows)
                    w1_ref,         # (in_dim, D)      bf16 VMEM (resident)
                    w2_ref,         # (D, D)           bf16 VMEM (resident)
                    b12_ref,        # (2, D)           f32  VMEM (b1 row 0, b2 row 1)
                    wv_ref,         # (num_views, D, D) bf16 VMEM (ALL views resident)
                    bv_ref,         # (num_views, 1, D) f32  VMEM (ALL views resident)
                    o_ref,          # (Rblk*B, D)      f32
                    base_ref,       # (Rblk*B, D)      bf16 VMEM scratch
                    *, rblk, batch):
    i = pl.program_id(0)
    b1 = b12_ref[0:1, :]
    b2 = b12_ref[1:2, :]

    # View-independent stage: one MXU-filling matmul pair for the whole block.
    x = x_ref[...].astype(jnp.bfloat16)
    h = jnp.dot(x, w1_ref[...], preferred_element_type=jnp.float32) + b1
    h = jnp.maximum(h, 0.0)                                       # ReLU (f32)
    g = jnp.dot(h.astype(jnp.bfloat16), w2_ref[...],
                preferred_element_type=jnp.float32) + b2
    base_ref[...] = jax.nn.sigmoid(g).astype(jnp.bfloat16)        # stage in VMEM

    # Per-request view-specific Linear against the VMEM-resident weight bank.
    def body(r, carry):
        vid = view_idx_ref[i * rblk + r]
        row0 = pl.multiple_of(r * batch, batch)
        rows = base_ref[pl.ds(row0, batch), :]
        out = jnp.dot(rows, wv_ref[vid],
                      preferred_element_type=jnp.float32) + bv_ref[vid]
        o_ref[pl.ds(row0, batch), :] = out.astype(o_ref.dtype)
        return carry

    jax.lax.fori_loop(0, rblk, body, 0, unroll=(rblk <= 16))


def _choose_rblk(R, B, target_m=128):
    """Requests per grid step; keeps M = rblk*B near 128 and 8-sublane aligned."""
    rblk = max(1, min(R, max(1, target_m // B)))
    while (rblk * B) % 8 != 0 and rblk < R:
        rblk += 1
    if (rblk * B) % 8 != 0:
        rblk = R            # single block == full extent, always a legal block
    return rblk


def view_index_cam_pose_encoder_batched(cam_params, view_idx, params, *, target_m=128):
    """cam_params: (R, B, in_dim) f32; view_idx: (R,) int — one view per request."""
    w1, w2, b12, wv, bv = params
    R, B, in_dim = cam_params.shape
    D = w1.shape[1]
    num_views = wv.shape[0]

    rblk = _choose_rblk(R, B, target_m)
    num_blocks = pl.cdiv(R, rblk)
    R_pad = num_blocks * rblk

    view_idx = jnp.asarray(view_idx, jnp.int32)
    x = cam_params
    if R_pad != R:
        x = jnp.pad(x, ((0, R_pad - R), (0, 0), (0, 0)))
        view_idx = jnp.pad(view_idx, (0, R_pad - R))
    x = x.reshape(R_pad * B, in_dim)

    kernel = functools.partial(_encoder_kernel, rblk=rblk, batch=B)

    grid_spec = pltpu.PrefetchScalarGridSpec(
        num_scalar_prefetch=1,
        grid=(num_blocks,),
        in_specs=[
            # per-block camera-param rows
            pl.BlockSpec((rblk * B, in_dim), lambda i, vidx: (i, 0)),
            # view-independent weights/biases: constant blocks -> DMA'd once, resident
            pl.BlockSpec((in_dim, D), lambda i, vidx: (0, 0)),
            pl.BlockSpec((D, D),      lambda i, vidx: (0, 0)),
            pl.BlockSpec((2, D),      lambda i, vidx: (0, 0)),
            # ALL per-view weights/biases resident; selected dynamically in-kernel
            pl.BlockSpec((num_views, D, D), lambda i, vidx: (0, 0, 0)),
            pl.BlockSpec((num_views, 1, D), lambda i, vidx: (0, 0, 0)),
        ],
        out_specs=pl.BlockSpec((rblk * B, D), lambda i, vidx: (i, 0)),
        scratch_shapes=[pltpu.VMEM((rblk * B, D), jnp.bfloat16)],
    )

    out = pl.pallas_call(
        kernel,
        out_shape=jax.ShapeDtypeStruct((R_pad * B, D), jnp.float32),
        grid_spec=grid_spec,
        compiler_params=pltpu.CompilerParams(
            dimension_semantics=("parallel",) if num_blocks > 1 else ("arbitrary",)),
    )(view_idx, x, w1, w2, b12, wv, bv)

    out = out.reshape(R_pad, B, D)
    return out[:R] if R_pad != R else out


def view_index_cam_pose_encoder(cam_params, view_idx, params):
    """Single-request wrapper matching the PyTorch forward(cam_params, view_idx)."""
    vidx = jnp.asarray(view_idx, jnp.int32).reshape((1,))
    return view_index_cam_pose_encoder_batched(cam_params[None], vidx, params)[0]


def init_params(key, input_dim=5, output_dim=256, num_views=4):
    """xavier_uniform weights / zero biases (matches _init_weights).

    Weights are stored transposed to (in, out) and cast to bf16 (halves weight
    DMA); biases stay f32, with b1/b2 consolidated into one (2, D) array.
    """
    def xavier(k, fan_in, fan_out, shape):
        bound = (6.0 / (fan_in + fan_out)) ** 0.5
        return jax.random.uniform(k, shape, jnp.float32, -bound, bound)

    k1, k2, k3 = jax.random.split(key, 3)
    w1 = xavier(k1, input_dim, output_dim, (input_dim, output_dim)).astype(jnp.bfloat16)
    w2 = xavier(k2, output_dim, output_dim, (output_dim, output_dim)).astype(jnp.bfloat16)
    b12 = jnp.zeros((2, output_dim), jnp.float32)
    kvs = jax.random.split(k3, num_views)
    wv = jnp.stack([xavier(kvs[i], output_dim, output_dim, (output_dim, output_dim))
                    for i in range(num_views)]).astype(jnp.bfloat16)
    bv = jnp.zeros((num_views, 1, output_dim), jnp.float32)
    return (w1, w2, b12, wv, bv)


def _reference(cam_params, view_idx, params):
    """Pure-JAX reference mirroring the kernel's bf16-input / f32-accumulate matmuls.

    cam_params: (R, B, in_dim); view_idx: (R,).
    """
    # TODO(synk): matches the kernel's bf16 weight/activation quantization rather
    # than exact f32 PyTorch Linear semantics (~2^-8 relative error per matmul).
    w1, w2, b12, wv, bv = params

    def mm(a, w):
        return jnp.dot(a.astype(jnp.bfloat16), w, preferred_element_type=jnp.float32)

    h = jnp.maximum(mm(cam_params, w1) + b12[0], 0.0)
    base = jax.nn.sigmoid(mm(h, w2) + b12[1])
    wv_sel = wv[view_idx]                      # (R, D, D)
    bv_sel = bv[view_idx]                      # (R, 1, D)
    return jnp.einsum('rbd,rde->rbe', base.astype(jnp.bfloat16), wv_sel,
                      preferred_element_type=jnp.float32) + bv_sel


if __name__ == "__main__":
    key = jax.random.PRNGKey(0)
    k_params, k_x1, k_x2, k_v = jax.random.split(key, 4)

    input_dim, output_dim, num_views = 5, 256, 4
    batch = 8

    params = init_params(k_params, input_dim=input_dim,
                         output_dim=output_dim, num_views=num_views)

    # --- Test 1: small request batch (single grid step, no padding) ---
    n_requests = 4
    cam_params = jax.random.normal(k_x1, (n_requests, batch, input_dim), jnp.float32)
    view_idx = jnp.array([2, 0, 3, 1], jnp.int32)

    out = view_index_cam_pose_encoder_batched(cam_params, view_idx, params)
    out = jax.block_until_ready(out)
    assert out.shape == (n_requests, batch, output_dim)
    ref = _reference(cam_params, view_idx, params)
    assert jnp.allclose(out, ref, rtol=1e-2, atol=1e-2), "batched (small) mismatch"

    # --- Test 2: larger request batch (multi-block grid, padding + fori_loop path) ---
    n_requests2 = 20
    cam_params2 = jax.random.normal(k_x2, (n_requests2, batch, input_dim), jnp.float32)
    view_idx2 = jax.random.randint(k_v, (n_requests2,), 0, num_views, jnp.int32)

    out2 = view_index_cam_pose_encoder_batched(cam_params2, view_idx2, params)
    out2 = jax.block_until_ready(out2)
    assert out2.shape == (n_requests2, batch, output_dim)
    ref2 = _reference(cam_params2, view_idx2, params)
    assert jnp.allclose(out2, ref2, rtol=1e-2, atol=1e-2), "batched (large) mismatch"

    # --- Test 3: single-request path (mirrors the PyTorch forward signature) ---
    out1 = view_index_cam_pose_encoder(cam_params[0], 2, params)
    out1 = jax.block_until_ready(out1)
    assert out1.shape == (batch, output_dim)
    ref1 = _reference(cam_params[0:1], jnp.array([2], jnp.int32), params)[0]
    assert jnp.allclose(out1, ref1, rtol=1e-2, atol=1e-2), "single mismatch"

    print("KERNEL_OK")
</pallas_src>

<mosaic_0001>
module attributes {stable_mosaic.version = 11 : i64} {
  func.func @_encoder_kernel(%arg0: i32, %arg1: memref<4xi32, #tpu.memory_space<smem>>, %arg2: memref<32x5xf32, #tpu.memory_space<vmem>>, %arg3: memref<5x256xbf16, #tpu.memory_space<vmem>>, %arg4: memref<256x256xbf16, #tpu.memory_space<vmem>>, %arg5: memref<2x256xf32, #tpu.memory_space<vmem>>, %arg6: memref<4x256x256xbf16, #tpu.memory_space<vmem>>, %arg7: memref<4x1x256xf32, #tpu.memory_space<vmem>>, %arg8: memref<32x256xf32, #tpu.memory_space<vmem>>, %arg9: memref<32x256xbf16, #tpu.memory_space<vmem>>) attributes {dimension_semantics = [#tpu.dimension_semantics<arbitrary>], iteration_bounds = array<i64: 1>, scalar_prefetch = 1 : i64, scratch_operands = 1 : i64, tpu.core_type = #tpu.core_type<tc>, window_params = [{transform_indices = @transform_0, window_bounds = array<i64: 32, 5>}, {pipeline_mode = #tpu.pipeline_mode<synchronous>, transform_indices = @transform_1, window_bounds = array<i64: 5, 256>}, {pipeline_mode = #tpu.pipeline_mode<synchronous>, transform_indices = @transform_2, window_bounds = array<i64: 256, 256>}, {pipeline_mode = #tpu.pipeline_mode<synchronous>, transform_indices = @transform_3, window_bounds = array<i64: 2, 256>}, {pipeline_mode = #tpu.pipeline_mode<synchronous>, transform_indices = @transform_4, window_bounds = array<i64: 4, 256, 256>}, {pipeline_mode = #tpu.pipeline_mode<synchronous>, transform_indices = @transform_5, window_bounds = array<i64: 4, 1, 256>}, {transform_indices = @transform_6, window_bounds = array<i64: 32, 256>}]} {
    %c0 = arith.constant 0 : index
    %c0_0 = arith.constant 0 : index
    %0 = vector.load %arg5[%c0, %c0_0] : memref<2x256xf32, #tpu.memory_space<vmem>>, vector<1x256xf32>
    %c1 = arith.constant 1 : index
    %c0_1 = arith.constant 0 : index
    %1 = vector.load %arg5[%c1, %c0_1] : memref<2x256xf32, #tpu.memory_space<vmem>>, vector<1x256xf32>
    %c0_2 = arith.constant 0 : index
    %c0_3 = arith.constant 0 : index
    %2 = vector.load %arg2[%c0_2, %c0_3] : memref<32x5xf32, #tpu.memory_space<vmem>>, vector<32x5xf32>
    %3 = arith.truncf %2 : vector<32x5xf32> to vector<32x5xbf16>
    %c0_4 = arith.constant 0 : index
    %c0_5 = arith.constant 0 : index
    %4 = vector.load %arg3[%c0_4, %c0_5] : memref<5x256xbf16, #tpu.memory_space<vmem>>, vector<5x256xbf16>
    %cst = arith.constant dense<0.000000e+00> : vector<32x256xf32>
    %5 = tpu.matmul %3, %4, %cst {dimension_numbers = #tpu.dot_dimension_numbers<[1], [0], [0], [1], [0, 0, 1, 1], [], []>} : vector<32x5xbf16>, vector<5x256xbf16>, vector<32x256xf32> -> vector<32x256xf32>
    %6 = vector.broadcast %0 : vector<1x256xf32> to vector<32x256xf32>
    %7 = arith.addf %5, %6 : vector<32x256xf32>
    %cst_6 = arith.constant 0.000000e+00 : f32
    %8 = vector.broadcast %cst_6 : f32 to vector<32x256xf32>
    %9 = arith.maximumf %7, %8 : vector<32x256xf32>
    %10 = arith.truncf %9 : vector<32x256xf32> to vector<32x256xbf16>
    %c0_7 = arith.constant 0 : index
    %c0_8 = arith.constant 0 : index
    %11 = vector.load %arg4[%c0_7, %c0_8] : memref<256x256xbf16, #tpu.memory_space<vmem>>, vector<256x256xbf16>
    %cst_9 = arith.constant dense<0.000000e+00> : vector<32x256xf32>
    %12 = tpu.matmul %10, %11, %cst_9 {dimension_numbers = #tpu.dot_dimension_numbers<[1], [0], [0], [1], [0, 0, 1, 1], [], []>} : vector<32x256xbf16>, vector<256x256xbf16>, vector<32x256xf32> -> vector<32x256xf32>
    %13 = vector.broadcast %1 : vector<1x256xf32> to vector<32x256xf32>
    %14 = arith.addf %12, %13 : vector<32x256xf32>
    %15 = arith.negf %14 : vector<32x256xf32>
    %16 = math.exp %15 : vector<32x256xf32>
    %cst_10 = arith.constant 1.000000e+00 : f32
    %17 = vector.broadcast %cst_10 : f32 to vector<32x256xf32>
    %18 = arith.addf %17, %16 : vector<32x256xf32>
    %19 = arith.divf %17, %18 : vector<32x256xf32>
    %20 = arith.truncf %19 : vector<32x256xf32> to vector<32x256xbf16>
    %c0_11 = arith.constant 0 : index
    %c0_12 = arith.constant 0 : index
    %21 = vector.load %arg9[%c0_11, %c0_12] : memref<32x256xbf16, #tpu.memory_space<vmem>>, vector<32x256xbf16>
    tpu.vector_store %arg9[%c0_11, %c0_12], %20 {strides = array<i32>} : memref<32x256xbf16, #tpu.memory_space<vmem>>, vector<32x256xbf16>,
    %c0_i32 = arith.constant 0 : i32
    %c4_i32 = arith.constant 4 : i32
    %22 = arith.muli %arg0, %c4_i32 : i32
    %23 = arith.addi %22, %c0_i32 : i32
    %24 = arith.index_cast %23 : i32 to index
    %25 = memref.load %arg1[%24] : memref<4xi32, #tpu.memory_space<smem>>
    %c8_i32 = arith.constant 8 : i32
    %26 = arith.muli %c0_i32, %c8_i32 : i32
    %27 = tpu.assume_multiple %26, 8 : i32
    %28 = arith.index_cast %27 : i32 to index
    %c0_13 = arith.constant 0 : index
    %29 = vector.load %arg9[%28, %c0_13] : memref<32x256xbf16, #tpu.memory_space<vmem>>, vector<8x256xbf16>
    %30 = arith.index_cast %25 : i32 to index
    %c0_14 = arith.constant 0 : index
    %c0_15 = arith.constant 0 : index
    %31 = vector.load %arg6[%30, %c0_14, %c0_15] : memref<4x256x256xbf16, #tpu.memory_space<vmem>>, vector<1x256x256xbf16>
    %32 = vector.shape_cast %31 : vector<1x256x256xbf16> to vector<256x256xbf16>
    %cst_16 = arith.constant dense<0.000000e+00> : vector<8x256xf32>
    %33 = tpu.matmul %29, %32, %cst_16 {dimension_numbers = #tpu.dot_dimension_numbers<[1], [0], [0], [1], [0, 0, 1, 1], [], []>} : vector<8x256xbf16>, vector<256x256xbf16>, vector<8x256xf32> -> vector<8x256xf32>
    %34 = arith.index_cast %25 : i32 to index
    %c0_17 = arith.constant 0 : index
    %c0_18 = arith.constant 0 : index
    %35 = vector.load %arg7[%34, %c0_17, %c0_18] : memref<4x1x256xf32, #tpu.memory_space<vmem>>, vector<1x1x256xf32>
    %36 = vector.shape_cast %35 : vector<1x1x256xf32> to vector<1x256xf32>
    %37 = vector.broadcast %36 : vector<1x256xf32> to vector<8x256xf32>
    %38 = arith.addf %33, %37 : vector<8x256xf32>
    %39 = arith.index_cast %27 : i32 to index
    %c0_19 = arith.constant 0 : index
    %40 = vector.load %arg8[%39, %c0_19] : memref<32x256xf32, #tpu.memory_space<vmem>>, vector<8x256xf32>
    tpu.vector_store %arg8[%39, %c0_19], %38 {strides = array<i32>} : memref<32x256xf32, #tpu.memory_space<vmem>>, vector<8x256xf32>,
    %c1_i32 = arith.constant 1 : i32
    %c4_i32_20 = arith.constant 4 : i32
    %41 = arith.muli %arg0, %c4_i32_20 : i32
    %42 = arith.addi %41, %c1_i32 : i32
    %43 = arith.index_cast %42 : i32 to index
    %44 = memref.load %arg1[%43] : memref<4xi32, #tpu.memory_space<smem>>
    %c8_i32_21 = arith.constant 8 : i32
    %45 = arith.muli %c1_i32, %c8_i32_21 : i32
    %46 = tpu.assume_multiple %45, 8 : i32
    %47 = arith.index_cast %46 : i32 to index
    %c0_22 = arith.constant 0 : index
    %48 = vector.load %arg9[%47, %c0_22] : memref<32x256xbf16, #tpu.memory_space<vmem>>, vector<8x256xbf16>
    %49 = arith.index_cast %44 : i32 to index
    %c0_23 = arith.constant 0 : index
    %c0_24 = arith.constant 0 : index
    %50 = vector.load %arg6[%49, %c0_23, %c0_24] : memref<4x256x256xbf16, #tpu.memory_space<vmem>>, vector<1x256x256xbf16>
    %51 = vector.shape_cast %50 : vector<1x256x256xbf16> to vector<256x256xbf16>
    %cst_25 = arith.constant dense<0.000000e+00> : vector<8x256xf32>
    %52 = tpu.matmul %48, %51, %cst_25 {dimension_numbers = #tpu.dot_dimension_numbers<[1], [0], [0], [1], [0, 0, 1, 1], [], []>} : vector<8x256xbf16>, vector<256x256xbf16>, vector<8x256xf32> -> vector<8x256xf32>
    %53 = arith.index_cast %44 : i32 to index
    %c0_26 = arith.constant 0 : index
    %c0_27 = arith.constant 0 : index
    %54 = vector.load %arg7[%53, %c0_26, %c0_27] : memref<4x1x256xf32, #tpu.memory_space<vmem>>, vector<1x1x256xf32>
    %55 = vector.shape_cast %54 : vector<1x1x256xf32> to vector<1x256xf32>
    %56 = vector.broadcast %55 : vector<1x256xf32> to vector<8x256xf32>
    %57 = arith.addf %52, %56 : vector<8x256xf32>
    %58 = arith.index_cast %46 : i32 to index
    %c0_28 = arith.constant 0 : index
    %59 = vector.load %arg8[%58, %c0_28] : memref<32x256xf32, #tpu.memory_space<vmem>>, vector<8x256xf32>
    tpu.vector_store %arg8[%58, %c0_28], %57 {strides = array<i32>} : memref<32x256xf32, #tpu.memory_space<vmem>>, vector<8x256xf32>,
    %c2_i32 = arith.constant 2 : i32
    %c4_i32_29 = arith.constant 4 : i32
    %60 = arith.muli %arg0, %c4_i32_29 : i32
    %61 = arith.addi %60, %c2_i32 : i32
    %62 = arith.index_cast %61 : i32 to index
    %63 = memref.load %arg1[%62] : memref<4xi32, #tpu.memory_space<smem>>
    %c8_i32_30 = arith.constant 8 : i32
    %64 = arith.muli %c2_i32, %c8_i32_30 : i32
    %65 = tpu.assume_multiple %64, 8 : i32
    %66 = arith.index_cast %65 : i32 to index
    %c0_31 = arith.constant 0 : index
    %67 = vector.load %arg9[%66, %c0_31] : memref<32x256xbf16, #tpu.memory_space<vmem>>, vector<8x256xbf16>
    %68 = arith.index_cast %63 : i32 to index
    %c0_32 = arith.constant 0 : index
    %c0_33 = arith.constant 0 : index
    %69 = vector.load %arg6[%68, %c0_32, %c0_33] : memref<4x256x256xbf16, #tpu.memory_space<vmem>>, vector<1x256x256xbf16>
    %70 = vector.shape_cast %69 : vector<1x256x256xbf16> to vector<256x256xbf16>
    %cst_34 = arith.constant dense<0.000000e+00> : vector<8x256xf32>
    %71 = tpu.matmul %67, %70, %cst_34 {dimension_numbers = #tpu.dot_dimension_numbers<[1], [0], [0], [1], [0, 0, 1, 1], [], []>} : vector<8x256xbf16>, vector<256x256xbf16>, vector<8x256xf32> -> vector<8x256xf32>
    %72 = arith.index_cast %63 : i32 to index
    %c0_35 = arith.constant 0 : index
    %c0_36 = arith.constant 0 : index
    %73 = vector.load %arg7[%72, %c0_35, %c0_36] : memref<4x1x256xf32, #tpu.memory_space<vmem>>, vector<1x1x256xf32>
    %74 = vector.shape_cast %73 : vector<1x1x256xf32> to vector<1x256xf32>
    %75 = vector.broadcast %74 : vector<1x256xf32> to vector<8x256xf32>
    %76 = arith.addf %71, %75 : vector<8x256xf32>
    %77 = arith.index_cast %65 : i32 to index
    %c0_37 = arith.constant 0 : index
    %78 = vector.load %arg8[%77, %c0_37] : memref<32x256xf32, #tpu.memory_space<vmem>>, vector<8x256xf32>
    tpu.vector_store %arg8[%77, %c0_37], %76 {strides = array<i32>} : memref<32x256xf32, #tpu.memory_space<vmem>>, vector<8x256xf32>,
    %c3_i32 = arith.constant 3 : i32
    %c4_i32_38 = arith.constant 4 : i32
    %79 = arith.muli %arg0, %c4_i32_38 : i32
    %80 = arith.addi %79, %c3_i32 : i32
    %81 = arith.index_cast %80 : i32 to index
    %82 = memref.load %arg1[%81] : memref<4xi32, #tpu.memory_space<smem>>
    %c8_i32_39 = arith.constant 8 : i32
    %83 = arith.muli %c3_i32, %c8_i32_39 : i32
    %84 = tpu.assume_multiple %83, 8 : i32
    %85 = arith.index_cast %84 : i32 to index
    %c0_40 = arith.constant 0 : index
    %86 = vector.load %arg9[%85, %c0_40] : memref<32x256xbf16, #tpu.memory_space<vmem>>, vector<8x256xbf16>
    %87 = arith.index_cast %82 : i32 to index
    %c0_41 = arith.constant 0 : index
    %c0_42 = arith.constant 0 : index
    %88 = vector.load %arg6[%87, %c0_41, %c0_42] : memref<4x256x256xbf16, #tpu.memory_space<vmem>>, vector<1x256x256xbf16>
    %89 = vector.shape_cast %88 : vector<1x256x256xbf16> to vector<256x256xbf16>
    %cst_43 = arith.constant dense<0.000000e+00> : vector<8x256xf32>
    %90 = tpu.matmul %86, %89, %cst_43 {dimension_numbers = #tpu.dot_dimension_numbers<[1], [0], [0], [1], [0, 0, 1, 1], [], []>} : vector<8x256xbf16>, vector<256x256xbf16>, vector<8x256xf32> -> vector<8x256xf32>
    %91 = arith.index_cast %82 : i32 to index
    %c0_44 = arith.constant 0 : index
    %c0_45 = arith.constant 0 : index
    %92 = vector.load %arg7[%91, %c0_44, %c0_45] : memref<4x1x256xf32, #tpu.memory_space<vmem>>, vector<1x1x256xf32>
    %93 = vector.shape_cast %92 : vector<1x1x256xf32> to vector<1x256xf32>
    %94 = vector.broadcast %93 : vector<1x256xf32> to vector<8x256xf32>
    %95 = arith.addf %90, %94 : vector<8x256xf32>
    %96 = arith.index_cast %84 : i32 to index
    %c0_46 = arith.constant 0 : index
    %97 = vector.load %arg8[%96, %c0_46] : memref<32x256xf32, #tpu.memory_space<vmem>>, vector<8x256xf32>
    tpu.vector_store %arg8[%96, %c0_46], %95 {strides = array<i32>} : memref<32x256xf32, #tpu.memory_space<vmem>>, vector<8x256xf32>,
    %c4_i32_47 = arith.constant 4 : i32
    return
  }
  func.func @transform_0(%arg0: i32, %arg1: memref<4xi32, #tpu.memory_space<smem>>) -> (i32, i32) {
    %c0_i32 = arith.constant 0 : i32
    %c0_i32_0 = arith.constant 0 : i32
    return %arg0, %c0_i32 : i32, i32
  }
  func.func @transform_1(%arg0: i32, %arg1: memref<4xi32, #tpu.memory_space<smem>>) -> (i32, i32) {
    %c0_i32 = arith.constant 0 : i32
    %c0_i32_0 = arith.constant 0 : i32
    %c0_i32_1 = arith.constant 0 : i32
    return %c0_i32, %c0_i32_0 : i32, i32
  }
  func.func @transform_2(%arg0: i32, %arg1: memref<4xi32, #tpu.memory_space<smem>>) -> (i32, i32) {
    %c0_i32 = arith.constant 0 : i32
    %c0_i32_0 = arith.constant 0 : i32
    %c0_i32_1 = arith.constant 0 : i32
    return %c0_i32, %c0_i32_0 : i32, i32
  }
  func.func @transform_3(%arg0: i32, %arg1: memref<4xi32, #tpu.memory_space<smem>>) -> (i32, i32) {
    %c0_i32 = arith.constant 0 : i32
    %c0_i32_0 = arith.constant 0 : i32
    %c0_i32_1 = arith.constant 0 : i32
    return %c0_i32, %c0_i32_0 : i32, i32
  }
  func.func @transform_4(%arg0: i32, %arg1: memref<4xi32, #tpu.memory_space<smem>>) -> (i32, i32, i32) {
    %c0_i32 = arith.constant 0 : i32
    %c0_i32_0 = arith.constant 0 : i32
    %c0_i32_1 = arith.constant 0 : i32
    %c0_i32_2 = arith.constant 0 : i32
    return %c0_i32, %c0_i32_0, %c0_i32_1 : i32, i32, i32
  }
  func.func @transform_5(%arg0: i32, %arg1: memref<4xi32, #tpu.memory_space<smem>>) -> (i32, i32, i32) {
    %c0_i32 = arith.constant 0 : i32
    %c0_i32_0 = arith.constant 0 : i32
    %c0_i32_1 = arith.constant 0 : i32
    %c0_i32_2 = arith.constant 0 : i32
    return %c0_i32, %c0_i32_0, %c0_i32_1 : i32, i32, i32
  }
  func.func @transform_6(%arg0: i32, %arg1: memref<4xi32, #tpu.memory_space<smem>>) -> (i32, i32) {
    %c0_i32 = arith.constant 0 : i32
    %c0_i32_0 = arith.constant 0 : i32
    return %arg0, %c0_i32 : i32, i32
  }
}

</mosaic_0001>

<llo_original>
// kernel: tpu_custom_call.1
$region0: #{tpu_custom_call.1}
  #allocation0 [shape = 'u32[]', space=smem, size = 0x4, offset = 0x4, fixed_abs, tag = 'smem constant byte address 0x4 - core index']
  #allocation1 [shape = 'u32[72,128]{1,0:T(1,128)}', space=vmem, size = 0x9000, scoped, tag = 'internal scratch']
  #allocation2 [shape = 'bf16[32,256]{1,0:T(8,128)(2,1)}', space=vmem, size = 0x4000, scoped, tag = 'scratch operand']
  #allocation3 [shape = 's32[1]{0}', space=sflag, size = 0x4, scoped, tag = 'scoped memory for tpu_custom_call.1']
  #allocation4 [shape = 'u8[512]{0}', space=smem, size = 0x200, scoped, tag = 'prefetched SMEM operand 0']
  %s0 = inlined_call_operand.vmem [shape: s32[4], index: 0, kind: input, shape index: {}]
  %s1 = inlined_call_operand.vmem [shape: f32[32,5], index: 1, kind: input, shape index: {}]
  %s2 = inlined_call_operand.vmem [shape: bf16[5,256], index: 2, kind: input, shape index: {}]
  %s3 = inlined_call_operand.hbm [shape: bf16[256,256], index: 3, kind: input, shape index: {}]
  %s4 = inlined_call_operand.vmem [shape: f32[2,256], index: 4, kind: input, shape index: {}]
  %s5 = inlined_call_operand.hbm [shape: bf16[4,256,256], index: 5, kind: input, shape index: {}]
  %s6 = inlined_call_operand.vmem [shape: f32[4,1,256], index: 6, kind: input, shape index: {}]
  %s7 = inlined_call_operand.hbm [shape: f32[32,256], index: 7, kind: output, shape index: {}]
  %s8 = sld [smem:[#allocation0]]
  $region42: #{tpu_custom_call.1} parent=0
    _
  %s10 = ssub.s32 1, %s8
  %s11 = scalar_select 0, %s10, %s8
  %s13 = sshll.u32 %s0, 4
  %s14 = int_to_ptr.vmem [resolvable:$true] %s13
  %16 = dma.vmem_to_smem %s14, 16, [#allocation4], [#allocation3]
  %18 = dma.done [#allocation3], 16
  %19 = sfence
  $region1: #{tpu_custom_call.1} parent=0
    #allocation5 [shape = 'u8[131072]{0}', space=vmem, size = 0x20000, scoped, tag = 'input window, operand 3, single buffered']
    #allocation6 [shape = 's32[1]{0}', space=sflag, size = 0x4, scoped, tag = 'scoped memory for tpu_custom_call.1']
    #allocation7 [shape = 's32[1]{0}', space=sflag, size = 0x4, scoped, tag = 'scoped memory for tpu_custom_call.1']
    #allocation8 [shape = 'u8[524288]{0}', space=vmem, size = 0x80000, scoped, tag = 'input window, operand 5, single buffered']
    #allocation9 [shape = 's32[1]{0}', space=sflag, size = 0x4, scoped, tag = 'scoped memory for tpu_custom_call.1']
    #allocation10 [shape = 'u8[32768]{0}', space=vmem, size = 0x8000, scoped, tag = 'output window, operand 0, single buffered']
    %20 = vsyncpa [#allocation6], 0
    %21 = vsyncpa [#allocation9], 0
    %22 = vsyncpa [#allocation7], 0
    // Predicated region
    $region2: #{tpu_custom_call.1} parent=1 // pred_check
      _
    $region3: #{tpu_custom_call.1} parent=1 // pred_check_branch
      %24 = sbr.rel (0) target = $region5
    $region4: #{tpu_custom_call.1} parent=1 // pred_region
      _
    $region5: #{tpu_custom_call.1} parent=1 // pred_fallthru
      _
    // Predicated region
    $region6: #{tpu_custom_call.1} parent=1 // pred_check
      _
    $region7: #{tpu_custom_call.1} parent=1 // pred_check_branch
      %26 = sbr.rel (0) target = $region9
    $region8: #{tpu_custom_call.1} parent=1 // pred_region
      _
    $region9: #{tpu_custom_call.1} parent=1 // pred_fallthru
      _
    // Predicated region
    $region10: #{tpu_custom_call.1} parent=1 // pred_check
      _
    $region11: #{tpu_custom_call.1} parent=1 // pred_check_branch
      %28 = sbr.rel (0) target = $region13
    $region12: #{tpu_custom_call.1} parent=1 // pred_region
      %30 = vsyncadd [#allocation6], 0
      %s31 = sshll.u32 %s3, 4
      %s32 = int_to_ptr.hbm [resolvable:$true] %s31
      %s33 = sshll.u32 [#allocation5], 4
      %s34 = int_to_ptr.vmem [resolvable:$true] %s33
      %39 = dma.hbm_to_vmem [thread:$0]  %s32, 4096, %s34, [#allocation6], 128, 128, 8
    $region13: #{tpu_custom_call.1} parent=1 // pred_fallthru
      _
    // Predicated region
    $region14: #{tpu_custom_call.1} parent=1 // pred_check
      _
    $region15: #{tpu_custom_call.1} parent=1 // pred_check_branch
      %41 = sbr.rel (0) target = $region17
    $region16: #{tpu_custom_call.1} parent=1 // pred_region
      _
    $region17: #{tpu_custom_call.1} parent=1 // pred_fallthru
      _
    // Predicated region
    $region18: #{tpu_custom_call.1} parent=1 // pred_check
      _
    $region19: #{tpu_custom_call.1} parent=1 // pred_check_branch
      %43 = sbr.rel (0) target = $region21
    $region20: #{tpu_custom_call.1} parent=1 // pred_region
      %45 = vsyncadd [#allocation9], 0
      %s46 = sshll.u32 %s5, 4
      %s47 = int_to_ptr.hbm [resolvable:$true] %s46
      %s48 = sshll.u32 [#allocation8], 4
      %s49 = int_to_ptr.vmem [resolvable:$true] %s48
      %54 = dma.hbm_to_vmem [thread:$0]  %s47, 16384, %s49, [#allocation9], 128, 128, 8
    $region21: #{tpu_custom_call.1} parent=1 // pred_fallthru
      _
    // Predicated region
    $region22: #{tpu_custom_call.1} parent=1 // pred_check
      _
    $region23: #{tpu_custom_call.1} parent=1 // pred_check_branch
      %56 = sbr.rel (0) target = $region25
    $region24: #{tpu_custom_call.1} parent=1 // pred_region
      _
    $region25: #{tpu_custom_call.1} parent=1 // pred_fallthru
      _
    // Predicated region
    $region26: #{tpu_custom_call.1} parent=1 // pred_check
      _
    $region27: #{tpu_custom_call.1} parent=1 // pred_check_branch
      %58 = sbr.rel (0) target = $region29
    $region28: #{tpu_custom_call.1} parent=1 // pred_region
      %60 = dma.done [#allocation6], 4096
    $region29: #{tpu_custom_call.1} parent=1 // pred_fallthru
      _
    // Predicated region
    $region30: #{tpu_custom_call.1} parent=1 // pred_check
      _
    $region31: #{tpu_custom_call.1} parent=1 // pred_check_branch
      %62 = sbr.rel (0) target = $region33
    $region32: #{tpu_custom_call.1} parent=1 // pred_region
      %64 = dma.done [#allocation9], 16384
    $region33: #{tpu_custom_call.1} parent=1 // pred_fallthru
      _
    %v66 = vld [vmem:[%s4] ss:$2 sm:$0x3]
    %s67 = scalar_lea.vmem %s4, 1
    %v68 = vld [vmem:[%s67] ss:$2 sm:$0x3]
    %v69 = vld [vmem:[%s1] sm:$0xff]
    %v70 = vld [vmem:[%s1 + $0x8] sm:$0xff]
    %v71 = vld [vmem:[%s1 + $0x10] sm:$0xff]
    %v72 = vld [vmem:[%s1 + $0x18] sm:$0xff]
    %v73 = vpack.c.bf16 %v70, %v69
    %v74 = vpack.c.bf16 %v72, %v71
    %v75 = vld [vmem:[%s2] sm:$0x77]
    %v77 = vperm.slane %v66, 0
    %v78 = vperm.slane %v66, 1
    %v82 = vunpack.c.l.b16 %v75
    %v83 = vunpack.c.h.b16 %v75
    %v84 = vpack.c.b16 %v82, %v82
    %v85 = vpack.c.b16 %v83, %v83
    %vm86 = vcmask 39936
    %v88 = vsel %vm86, %v73, 0
    %v91 = vsel %vm86, %v74, 0
    %vm93 = vcmask 1041408
    %vm94 = vcmask 1042432
    %v95 = vsel %vm93, 4294967295, 65535
    %v96 = vsel %vm94, %v95, 0
    %v98 = vand.u32 %v84, %v96
    %v101 = vand.u32 %v85, %v96
    %103 = vmatpush.bf16.msra.mxu0 0
    %104 = vmatpush.bf16.msra.mxu0 0
    %105 = vmatpush.bf16.msra.mxu0 0
    %106 = vmatpush.bf16.msra.mxu0 0
    %107 = vmatpush.bf16.msra.mxu0 0
    %108 = vmatpush.bf16.msra.mxu0 0
    %109 = vmatpush.bf16.msra.mxu0 0
    %110 = vmatpush.bf16.msra.mxu0 %v98
    %111 = vmatmul.bf16.gmra.mxu0 %v88
    %v112 = vpop.f32.mrf.mxu0
    %v113 = vadd.f32 %v77, %v112
    %v114 = vpop.f32.mrf.mxu0
    %v115 = vadd.f32 %v77, %v114
    %116 = vmatmul.bf16.gmra.mxu0 %v91
    %v117 = vpop.f32.mrf.mxu0
    %v118 = vadd.f32 %v77, %v117
    %v119 = vpop.f32.mrf.mxu0
    %v120 = vadd.f32 %v77, %v119
    %121 = vdwg.mxu0
    %122 = vmatpush.bf16.msra.mxu0 0
    %123 = vmatpush.bf16.msra.mxu0 0
    %124 = vmatpush.bf16.msra.mxu0 0
    %125 = vmatpush.bf16.msra.mxu0 0
    %126 = vmatpush.bf16.msra.mxu0 0
    %127 = vmatpush.bf16.msra.mxu0 0
    %128 = vmatpush.bf16.msra.mxu0 0
    %129 = vmatpush.bf16.msra.mxu0 %v101
    %130 = vmatmul.bf16.gmra.mxu0 %v88
    %v131 = vpop.f32.mrf.mxu0
    %v132 = vadd.f32 %v78, %v131
    %v133 = vpop.f32.mrf.mxu0
    %v134 = vadd.f32 %v78, %v133
    %135 = vmatmul.bf16.gmra.mxu0 %v91
    %v136 = vpop.f32.mrf.mxu0
    %v137 = vadd.f32 %v78, %v136
    %v138 = vpop.f32.mrf.mxu0
    %v139 = vadd.f32 %v78, %v138
    %140 = vdwg.mxu0
    %v141 = vmax.f32 %v113, 0.0
    %v142 = vmax.f32 %v132, 0.0
    %v143 = vmax.f32 %v115, 0.0
    %v144 = vmax.f32 %v134, 0.0
    %v145 = vmax.f32 %v118, 0.0
    %v146 = vmax.f32 %v137, 0.0
    %v147 = vmax.f32 %v120, 0.0
    %v148 = vmax.f32 %v139, 0.0
    %v149 = vpack.c.bf16 %v143, %v141
    %v150 = vpack.c.bf16 %v144, %v142
    %v151 = vpack.c.bf16 %v147, %v145
    %v152 = vpack.c.bf16 %v148, %v146
    %v153 = vld [vmem:[#allocation5] sm:$0xff]
    %v154 = vld [vmem:[#allocation5 + $0x8] sm:$0xff]
    %v155 = vld [vmem:[#allocation5 + $0x10] sm:$0xff]
    %v156 = vld [vmem:[#allocation5 + $0x18] sm:$0xff]
    %v157 = vld [vmem:[#allocation5 + $0x20] sm:$0xff]
    %v158 = vld [vmem:[#allocation5 + $0x28] sm:$0xff]
    %v159 = vld [vmem:[#allocation5 + $0x30] sm:$0xff]
    %v160 = vld [vmem:[#allocation5 + $0x38] sm:$0xff]
    %v161 = vld [vmem:[#allocation5 + $0x40] sm:$0xff]
    %v162 = vld [vmem:[#allocation5 + $0x48] sm:$0xff]
    %v163 = vld [vmem:[#allocation5 + $0x50] sm:$0xff]
    %v164 = vld [vmem:[#allocation5 + $0x58] sm:$0xff]
    %v165 = vld [vmem:[#allocation5 + $0x60] sm:$0xff]
    %v166 = vld [vmem:[#allocation5 + $0x68] sm:$0xff]
    %v167 = vld [vmem:[#allocation5 + $0x70] sm:$0xff]
    %v168 = vld [vmem:[#allocation5 + $0x78] sm:$0xff]
    %v169 = vld [vmem:[#allocation5 + $0x80] sm:$0xff]
    %v170 = vld [vmem:[#allocation5 + $0x88] sm:$0xff]
    %v171 = vld [vmem:[#allocation5 + $0x90] sm:$0xff]
    %v172 = vld [vmem:[#allocation5 + $0x98] sm:$0xff]
    %v173 = vld [vmem:[#allocation5 + $0xa0] sm:$0xff]
    %v174 = vld [vmem:[#allocation5 + $0xa8] sm:$0xff]
    %v175 = vld [vmem:[#allocation5 + $0xb0] sm:$0xff]
    %v176 = vld [vmem:[#allocation5 + $0xb8] sm:$0xff]
    %v177 = vld [vmem:[#allocation5 + $0xc0] sm:$0xff]
    %v178 = vld [vmem:[#allocation5 + $0xc8] sm:$0xff]
    %v179 = vld [vmem:[#allocation5 + $0xd0] sm:$0xff]
    %v180 = vld [vmem:[#allocation5 + $0xd8] sm:$0xff]
    %v181 = vld [vmem:[#allocation5 + $0xe0] sm:$0xff]
    %v182 = vld [vmem:[#allocation5 + $0xe8] sm:$0xff]
    %v183 = vld [vmem:[#allocation5 + $0xf0] sm:$0xff]
    %v184 = vld [vmem:[#allocation5 + $0xf8] sm:$0xff]
    %v186 = vperm.slane %v68, 0
    %v187 = vperm.slane %v68, 1
    %v222 = vunpack.c.l.b16 %v153
    %v223 = vunpack.c.h.b16 %v153
    %v224 = vunpack.c.l.b16 %v154
    %v225 = vunpack.c.h.b16 %v154
    %v226 = vunpack.c.l.b16 %v155
    %v227 = vunpack.c.h.b16 %v155
    %v228 = vunpack.c.l.b16 %v156
    %v229 = vunpack.c.h.b16 %v156
    %v230 = vunpack.c.l.b16 %v157
    %v231 = vunpack.c.h.b16 %v157
    %v232 = vunpack.c.l.b16 %v158
    %v233 = vunpack.c.h.b16 %v158
    %v234 = vunpack.c.l.b16 %v159
    %v235 = vunpack.c.h.b16 %v159
    %v236 = vunpack.c.l.b16 %v160
    %v237 = vunpack.c.h.b16 %v160
    %v238 = vunpack.c.l.b16 %v161
    %v239 = vunpack.c.h.b16 %v161
    %v240 = vunpack.c.l.b16 %v162
    %v241 = vunpack.c.h.b16 %v162
    %v242 = vunpack.c.l.b16 %v163
    %v243 = vunpack.c.h.b16 %v163
    %v244 = vunpack.c.l.b16 %v164
    %v245 = vunpack.c.h.b16 %v164
    %v246 = vunpack.c.l.b16 %v165
    %v247 = vunpack.c.h.b16 %v165
    %v248 = vunpack.c.l.b16 %v166
    %v249 = vunpack.c.h.b16 %v166
    %v250 = vunpack.c.l.b16 %v167
    %v251 = vunpack.c.h.b16 %v167
    %v252 = vunpack.c.l.b16 %v168
    %v253 = vunpack.c.h.b16 %v168
    %v254 = vunpack.c.l.b16 %v169
    %v255 = vunpack.c.h.b16 %v169
    %v256 = vunpack.c.l.b16 %v170
    %v257 = vunpack.c.h.b16 %v170
    %v258 = vunpack.c.l.b16 %v171
    %v259 = vunpack.c.h.b16 %v171
    %v260 = vunpack.c.l.b16 %v172
    %v261 = vunpack.c.h.b16 %v172
    %v262 = vunpack.c.l.b16 %v173
    %v263 = vunpack.c.h.b16 %v173
    %v264 = vunpack.c.l.b16 %v174
    %v265 = vunpack.c.h.b16 %v174
    %v266 = vunpack.c.l.b16 %v175
    %v267 = vunpack.c.h.b16 %v175
    %v268 = vunpack.c.l.b16 %v176
    %v269 = vunpack.c.h.b16 %v176
    %v270 = vunpack.c.l.b16 %v177
    %v271 = vunpack.c.h.b16 %v177
    %v272 = vunpack.c.l.b16 %v178
    %v273 = vunpack.c.h.b16 %v178
    %v274 = vunpack.c.l.b16 %v179
    %v275 = vunpack.c.h.b16 %v179
    %v276 = vunpack.c.l.b16 %v180
    %v277 = vunpack.c.h.b16 %v180
    %v278 = vunpack.c.l.b16 %v181
    %v279 = vunpack.c.h.b16 %v181
    %v280 = vunpack.c.l.b16 %v182
    %v281 = vunpack.c.h.b16 %v182
    %v282 = vunpack.c.l.b16 %v183
    %v283 = vunpack.c.h.b16 %v183
    %v284 = vunpack.c.l.b16 %v184
    %v285 = vunpack.c.h.b16 %v184
    %v286 = vpack.c.b16 %v224, %v222
    %v287 = vpack.c.b16 %v225, %v223
    %v288 = vpack.c.b16 %v228, %v226
    %v289 = vpack.c.b16 %v229, %v227
    %v290 = vpack.c.b16 %v232, %v230
    %v291 = vpack.c.b16 %v233, %v231
    %v292 = vpack.c.b16 %v236, %v234
    %v293 = vpack.c.b16 %v237, %v235
    %v294 = vpack.c.b16 %v240, %v238
    %v295 = vpack.c.b16 %v241, %v239
    %v296 = vpack.c.b16 %v244, %v242
    %v297 = vpack.c.b16 %v245, %v243
    %v298 = vpack.c.b16 %v248, %v246
    %v299 = vpack.c.b16 %v249, %v247
    %v300 = vpack.c.b16 %v252, %v250
    %v301 = vpack.c.b16 %v253, %v251
    %v302 = vpack.c.b16 %v256, %v254
    %v303 = vpack.c.b16 %v257, %v255
    %v304 = vpack.c.b16 %v260, %v258
    %v305 = vpack.c.b16 %v261, %v259
    %v306 = vpack.c.b16 %v264, %v262
    %v307 = vpack.c.b16 %v265, %v263
    %v308 = vpack.c.b16 %v268, %v266
    %v309 = vpack.c.b16 %v269, %v267
    %v310 = vpack.c.b16 %v272, %v270
    %v311 = vpack.c.b16 %v273, %v271
    %v312 = vpack.c.b16 %v276, %v274
    %v313 = vpack.c.b16 %v277, %v275
    %v314 = vpack.c.b16 %v280, %v278
    %v315 = vpack.c.b16 %v281, %v279
    %v316 = vpack.c.b16 %v284, %v282
    %v317 = vpack.c.b16 %v285, %v283
    %350 = vmatpush.bf16.msra.mxu0 %v300
    %351 = vmatpush.bf16.msra.mxu0 %v298
    %352 = vmatpush.bf16.msra.mxu0 %v296
    %353 = vmatpush.bf16.msra.mxu0 %v294
    %354 = vmatpush.bf16.msra.mxu0 %v292
    %355 = vmatpush.bf16.msra.mxu0 %v290
    %356 = vmatpush.bf16.msra.mxu0 %v288
    %357 = vmatpush.bf16.msra.mxu0 %v286
    %358 = vmatmul.bf16.gmra.mxu0 %v149
    %v359 = vpop.f32.mrf.mxu0
    %v360 = vadd.f32 %v186, %v359
    %v361 = vpop.f32.mrf.mxu0
    %v362 = vadd.f32 %v186, %v361
    %363 = vmatmul.bf16.gmra.mxu0 %v151
    %v364 = vpop.f32.mrf.mxu0
    %v365 = vadd.f32 %v186, %v364
    %v366 = vpop.f32.mrf.mxu0
    %v367 = vadd.f32 %v186, %v366
    %368 = vdwg.mxu0
    %369 = vmatpush.bf16.msra.mxu0 %v316
    %370 = vmatpush.bf16.msra.mxu0 %v314
    %371 = vmatpush.bf16.msra.mxu0 %v312
    %372 = vmatpush.bf16.msra.mxu0 %v310
    %373 = vmatpush.bf16.msra.mxu0 %v308
    %374 = vmatpush.bf16.msra.mxu0 %v306
    %375 = vmatpush.bf16.msra.mxu0 %v304
    %376 = vmatpush.bf16.msra.mxu0 %v302
    %377 = vmatmul.bf16.gmra.mxu0 %v150
    %v378 = vpop.f32.mrf.mxu0
    %v379 = vadd.f32 %v360, %v378
    %v380 = vpop.f32.mrf.mxu0
    %v381 = vadd.f32 %v362, %v380
    %382 = vmatmul.bf16.gmra.mxu0 %v152
    %v383 = vpop.f32.mrf.mxu0
    %v384 = vadd.f32 %v365, %v383
    %v385 = vpop.f32.mrf.mxu0
    %v386 = vadd.f32 %v367, %v385
    %387 = vdwg.mxu0
    %388 = vmatpush.bf16.msra.mxu0 %v301
    %389 = vmatpush.bf16.msra.mxu0 %v299
    %390 = vmatpush.bf16.msra.mxu0 %v297
    %391 = vmatpush.bf16.msra.mxu0 %v295
    %392 = vmatpush.bf16.msra.mxu0 %v293
    %393 = vmatpush.bf16.msra.mxu0 %v291
    %394 = vmatpush.bf16.msra.mxu0 %v289
    %395 = vmatpush.bf16.msra.mxu0 %v287
    %396 = vmatmul.bf16.gmra.mxu0 %v149
    %v397 = vpop.f32.mrf.mxu0
    %v398 = vadd.f32 %v187, %v397
    %v399 = vpop.f32.mrf.mxu0
    %v400 = vadd.f32 %v187, %v399
    %401 = vmatmul.bf16.gmra.mxu0 %v151
    %v402 = vpop.f32.mrf.mxu0
    %v403 = vadd.f32 %v187, %v402
    %v404 = vpop.f32.mrf.mxu0
    %v405 = vadd.f32 %v187, %v404
    %406 = vdwg.mxu0
    %407 = vmatpush.bf16.msra.mxu0 %v317
    %408 = vmatpush.bf16.msra.mxu0 %v315
    %409 = vmatpush.bf16.msra.mxu0 %v313
    %410 = vmatpush.bf16.msra.mxu0 %v311
    %411 = vmatpush.bf16.msra.mxu0 %v309
    %412 = vmatpush.bf16.msra.mxu0 %v307
    %413 = vmatpush.bf16.msra.mxu0 %v305
    %414 = vmatpush.bf16.msra.mxu0 %v303
    %415 = vmatmul.bf16.gmra.mxu0 %v150
    %v416 = vpop.f32.mrf.mxu0
    %v417 = vadd.f32 %v398, %v416
    %v418 = vpop.f32.mrf.mxu0
    %v419 = vadd.f32 %v400, %v418
    %420 = vmatmul.bf16.gmra.mxu0 %v152
    %v421 = vpop.f32.mrf.mxu0
    %v422 = vadd.f32 %v403, %v421
    %v423 = vpop.f32.mrf.mxu0
    %v424 = vadd.f32 %v405, %v423
    %425 = vdwg.mxu0
    %v426 = vxor.u32 %v379, 2147483648
    %v427 = vxor.u32 %v417, 2147483648
    %v428 = vxor.u32 %v381, 2147483648
    %v429 = vxor.u32 %v419, 2147483648
    %v430 = vxor.u32 %v384, 2147483648
    %v431 = vxor.u32 %v422, 2147483648
    %v432 = vxor.u32 %v386, 2147483648
    %v433 = vxor.u32 %v424, 2147483648
    %v434 = vmul.f32 %v426, 1.442695
    %v435 = vpow.pop %v434
    %v436 = vmul.f32 %v427, 1.442695
    %v437 = vpow.pop %v436
    %v438 = vmul.f32 %v428, 1.442695
    %v439 = vpow.pop %v438
    %v440 = vmul.f32 %v429, 1.442695
    %v441 = vpow.pop %v440
    %v442 = vmul.f32 %v430, 1.442695
    %v443 = vpow.pop %v442
    %v444 = vmul.f32 %v431, 1.442695
    %v445 = vpow.pop %v444
    %v446 = vmul.f32 %v432, 1.442695
    %v447 = vpow.pop %v446
    %v448 = vmul.f32 %v433, 1.442695
    %v449 = vpow.pop %v448
    %v450 = vadd.f32 %v435, 1.0
    %v451 = vadd.f32 %v437, 1.0
    %v452 = vadd.f32 %v439, 1.0
    %v453 = vadd.f32 %v441, 1.0
    %v454 = vadd.f32 %v443, 1.0
    %v455 = vadd.f32 %v445, 1.0
    %v456 = vadd.f32 %v447, 1.0
    %v457 = vadd.f32 %v449, 1.0
    %v458 = vrcp.pop %v450
    %v459 = vmul.f32 %v450, %v458
    %v460 = vsub.f32 1.0, %v459
    %v461 = vmul.f32 %v458, %v460
    %v462 = vadd.f32 %v458, %v461
    %vm463 = vweird.f32 %v450
    %vm464 = vweird.f32 %v458
    %vm465 = vmor %vm463, %vm464
    %v466 = vsel %vm465, %v458, %v462
    %v467 = vand.u32 2147483647, %v450
    %vm468 = vcmp.eq.f32.partialorder %v467, 8.507059e+37
    %v469 = vand.u32 %v450, 2147483648
    %v470 = vor.u32 1.1754944e-38, %v469
    %v471 = vsel %vm468, %v470, %v466
    %v472 = vmul.f32 1.0, %v471
    %v473 = vrcp.pop %v451
    %v474 = vmul.f32 %v451, %v473
    %v475 = vsub.f32 1.0, %v474
    %v476 = vmul.f32 %v473, %v475
    %v477 = vadd.f32 %v473, %v476
    %vm478 = vweird.f32 %v451
    %vm479 = vweird.f32 %v473
    %vm480 = vmor %vm478, %vm479
    %v481 = vsel %vm480, %v473, %v477
    %v482 = vand.u32 2147483647, %v451
    %vm483 = vcmp.eq.f32.partialorder %v482, 8.507059e+37
    %v484 = vand.u32 %v451, 2147483648
    %v485 = vor.u32 1.1754944e-38, %v484
    %v486 = vsel %vm483, %v485, %v481
    %v487 = vmul.f32 1.0, %v486
    %v488 = vrcp.pop %v452
    %v489 = vmul.f32 %v452, %v488
    %v490 = vsub.f32 1.0, %v489
    %v491 = vmul.f32 %v488, %v490
    %v492 = vadd.f32 %v488, %v491
    %vm493 = vweird.f32 %v452
    %vm494 = vweird.f32 %v488
    %vm495 = vmor %vm493, %vm494
    %v496 = vsel %vm495, %v488, %v492
    %v497 = vand.u32 2147483647, %v452
    %vm498 = vcmp.eq.f32.partialorder %v497, 8.507059e+37
    %v499 = vand.u32 %v452, 2147483648
    %v500 = vor.u32 1.1754944e-38, %v499
    %v501 = vsel %vm498, %v500, %v496
    %v502 = vmul.f32 1.0, %v501
    %v503 = vrcp.pop %v453
    %v504 = vmul.f32 %v453, %v503
    %v505 = vsub.f32 1.0, %v504
    %v506 = vmul.f32 %v503, %v505
    %v507 = vadd.f32 %v503, %v506
    %vm508 = vweird.f32 %v453
    %vm509 = vweird.f32 %v503
    %vm510 = vmor %vm508, %vm509
    %v511 = vsel %vm510, %v503, %v507
    %v512 = vand.u32 2147483647, %v453
    %vm513 = vcmp.eq.f32.partialorder %v512, 8.507059e+37
    %v514 = vand.u32 %v453, 2147483648
    %v515 = vor.u32 1.1754944e-38, %v514
    %v516 = vsel %vm513, %v515, %v511
    %v517 = vmul.f32 1.0, %v516
    %v518 = vrcp.pop %v454
    %v519 = vmul.f32 %v454, %v518
    %v520 = vsub.f32 1.0, %v519
    %v521 = vmul.f32 %v518, %v520
    %v522 = vadd.f32 %v518, %v521
    %vm523 = vweird.f32 %v454
    %vm524 = vweird.f32 %v518
    %vm525 = vmor %vm523, %vm524
    %v526 = vsel %vm525, %v518, %v522
    %v527 = vand.u32 2147483647, %v454
    %vm528 = vcmp.eq.f32.partialorder %v527, 8.507059e+37
    %v529 = vand.u32 %v454, 2147483648
    %v530 = vor.u32 1.1754944e-38, %v529
    %v531 = vsel %vm528, %v530, %v526
    %v532 = vmul.f32 1.0, %v531
    %v533 = vrcp.pop %v455
    %v534 = vmul.f32 %v455, %v533
    %v535 = vsub.f32 1.0, %v534
    %v536 = vmul.f32 %v533, %v535
    %v537 = vadd.f32 %v533, %v536
    %vm538 = vweird.f32 %v455
    %vm539 = vweird.f32 %v533
    %vm540 = vmor %vm538, %vm539
    %v541 = vsel %vm540, %v533, %v537
    %v542 = vand.u32 2147483647, %v455
    %vm543 = vcmp.eq.f32.partialorder %v542, 8.507059e+37
    %v544 = vand.u32 %v455, 2147483648
    %v545 = vor.u32 1.1754944e-38, %v544
    %v546 = vsel %vm543, %v545, %v541
    %v547 = vmul.f32 1.0, %v546
    %v548 = vrcp.pop %v456
    %v549 = vmul.f32 %v456, %v548
    %v550 = vsub.f32 1.0, %v549
    %v551 = vmul.f32 %v548, %v550
    %v552 = vadd.f32 %v548, %v551
    %vm553 = vweird.f32 %v456
    %vm554 = vweird.f32 %v548
    %vm555 = vmor %vm553, %vm554
    %v556 = vsel %vm555, %v548, %v552
    %v557 = vand.u32 2147483647, %v456
    %vm558 = vcmp.eq.f32.partialorder %v557, 8.507059e+37
    %v559 = vand.u32 %v456, 2147483648
    %v560 = vor.u32 1.1754944e-38, %v559
    %v561 = vsel %vm558, %v560, %v556
    %v562 = vmul.f32 1.0, %v561
    %v563 = vrcp.pop %v457
    %v564 = vmul.f32 %v457, %v563
    %v565 = vsub.f32 1.0, %v564
    %v566 = vmul.f32 %v563, %v565
    %v567 = vadd.f32 %v563, %v566
    %vm568 = vweird.f32 %v457
    %vm569 = vweird.f32 %v563
    %vm570 = vmor %vm568, %vm569
    %v571 = vsel %vm570, %v563, %v567
    %v572 = vand.u32 2147483647, %v457
    %vm573 = vcmp.eq.f32.partialorder %v572, 8.507059e+37
    %v574 = vand.u32 %v457, 2147483648
    %v575 = vor.u32 1.1754944e-38, %v574
    %v576 = vsel %vm573, %v575, %v571
    %v577 = vmul.f32 1.0, %v576
    %v578 = vpack.c.bf16 %v487, %v472
    %v579 = vpack.c.bf16 %v517, %v502
    %v580 = vpack.c.bf16 %v547, %v532
    %v581 = vpack.c.bf16 %v577, %v562
    %582 = vst [vmem:[#allocation2] sm:$0xff] %v578
    %583 = vst [vmem:[#allocation2 + $0x8] sm:$0xff] %v579
    %584 = vst [vmem:[#allocation2 + $0x10] sm:$0xff] %v580
    %585 = vst [vmem:[#allocation2 + $0x18] sm:$0xff] %v581
    %s586 = smul.u32 0, 4
    %s587 = sld [smem:[#allocation4 + %s586]]
    %s588 = smul.u32 0, 2
    %s589 = smul.addr %s588, 4
    %s590 = scalar_lea.vmem [#allocation2], %s589
    %v591 = vld [vmem:[%s590] sm:$0xff]
    %s592 = smul.u32 %s587, 64
    %s593 = smul.addr %s592, 4
    %s594 = scalar_lea.vmem [#allocation8], %s593
    %v595 = vld [vmem:[%s594] sm:$0xff]
    %v596 = vld [vmem:[%s594 + $0x8] sm:$0xff]
    %v597 = vld [vmem:[%s594 + $0x10] sm:$0xff]
    %v598 = vld [vmem:[%s594 + $0x18] sm:$0xff]
    %v599 = vld [vmem:[%s594 + $0x20] sm:$0xff]
    %v600 = vld [vmem:[%s594 + $0x28] sm:$0xff]
    %v601 = vld [vmem:[%s594 + $0x30] sm:$0xff]
    %v602 = vld [vmem:[%s594 + $0x38] sm:$0xff]
    %v603 = vld [vmem:[%s594 + $0x40] sm:$0xff]
    %v604 = vld [vmem:[%s594 + $0x48] sm:$0xff]
    %v605 = vld [vmem:[%s594 + $0x50] sm:$0xff]
    %v606 = vld [vmem:[%s594 + $0x58] sm:$0xff]
    %v607 = vld [vmem:[%s594 + $0x60] sm:$0xff]
    %v608 = vld [vmem:[%s594 + $0x68] sm:$0xff]
    %v609 = vld [vmem:[%s594 + $0x70] sm:$0xff]
    %v610 = vld [vmem:[%s594 + $0x78] sm:$0xff]
    %v611 = vld [vmem:[%s594 + $0x80] sm:$0xff]
    %v612 = vld [vmem:[%s594 + $0x88] sm:$0xff]
    %v613 = vld [vmem:[%s594 + $0x90] sm:$0xff]
    %v614 = vld [vmem:[%s594 + $0x98] sm:$0xff]
    %v615 = vld [vmem:[%s594 + $0xa0] sm:$0xff]
    %v616 = vld [vmem:[%s594 + $0xa8] sm:$0xff]
    %v617 = vld [vmem:[%s594 + $0xb0] sm:$0xff]
    %v618 = vld [vmem:[%s594 + $0xb8] sm:$0xff]
    %v619 = vld [vmem:[%s594 + $0xc0] sm:$0xff]
    %v620 = vld [vmem:[%s594 + $0xc8] sm:$0xff]
    %v621 = vld [vmem:[%s594 + $0xd0] sm:$0xff]
    %v622 = vld [vmem:[%s594 + $0xd8] sm:$0xff]
    %v623 = vld [vmem:[%s594 + $0xe0] sm:$0xff]
    %v624 = vld [vmem:[%s594 + $0xe8] sm:$0xff]
    %v625 = vld [vmem:[%s594 + $0xf0] sm:$0xff]
    %v626 = vld [vmem:[%s594 + $0xf8] sm:$0xff]
    %s627 = smul.u32 %s587, 2
    %s628 = scalar_lea.vmem %s6, %s627
    %v629 = vld [vmem:[%s628] sm:$0x3]
    %v631 = vperm.slane %v629, 0
    %v632 = vperm.slane %v629, 1
    %v636 = vunpack.c.l.b16 %v591
    %v637 = vunpack.c.h.b16 %v591
    %v638 = vpack.c.b16 %v636, %v636
    %v639 = vpack.c.b16 %v637, %v637
    %v674 = vunpack.c.l.b16 %v595
    %v675 = vunpack.c.h.b16 %v595
    %v676 = vunpack.c.l.b16 %v596
    %v677 = vunpack.c.h.b16 %v596
    %v678 = vunpack.c.l.b16 %v597
    %v679 = vunpack.c.h.b16 %v597
    %v680 = vunpack.c.l.b16 %v598
    %v681 = vunpack.c.h.b16 %v598
    %v682 = vunpack.c.l.b16 %v599
    %v683 = vunpack.c.h.b16 %v599
    %v684 = vunpack.c.l.b16 %v600
    %v685 = vunpack.c.h.b16 %v600
    %v686 = vunpack.c.l.b16 %v601
    %v687 = vunpack.c.h.b16 %v601
    %v688 = vunpack.c.l.b16 %v602
    %v689 = vunpack.c.h.b16 %v602
    %v690 = vunpack.c.l.b16 %v603
    %v691 = vunpack.c.h.b16 %v603
    %v692 = vunpack.c.l.b16 %v604
    %v693 = vunpack.c.h.b16 %v604
    %v694 = vunpack.c.l.b16 %v605
    %v695 = vunpack.c.h.b16 %v605
    %v696 = vunpack.c.l.b16 %v606
    %v697 = vunpack.c.h.b16 %v606
    %v698 = vunpack.c.l.b16 %v607
    %v699 = vunpack.c.h.b16 %v607
    %v700 = vunpack.c.l.b16 %v608
    %v701 = vunpack.c.h.b16 %v608
    %v702 = vunpack.c.l.b16 %v609
    %v703 = vunpack.c.h.b16 %v609
    %v704 = vunpack.c.l.b16 %v610
    %v705 = vunpack.c.h.b16 %v610
    %v706 = vunpack.c.l.b16 %v611
    %v707 = vunpack.c.h.b16 %v611
    %v708 = vunpack.c.l.b16 %v612
    %v709 = vunpack.c.h.b16 %v612
    %v710 = vunpack.c.l.b16 %v613
    %v711 = vunpack.c.h.b16 %v613
    %v712 = vunpack.c.l.b16 %v614
    %v713 = vunpack.c.h.b16 %v614
    %v714 = vunpack.c.l.b16 %v615
    %v715 = vunpack.c.h.b16 %v615
    %v716 = vunpack.c.l.b16 %v616
    %v717 = vunpack.c.h.b16 %v616
    %v718 = vunpack.c.l.b16 %v617
    %v719 = vunpack.c.h.b16 %v617
    %v720 = vunpack.c.l.b16 %v618
    %v721 = vunpack.c.h.b16 %v618
    %v722 = vunpack.c.l.b16 %v619
    %v723 = vunpack.c.h.b16 %v619
    %v724 = vunpack.c.l.b16 %v620
    %v725 = vunpack.c.h.b16 %v620
    %v726 = vunpack.c.l.b16 %v621
    %v727 = vunpack.c.h.b16 %v621
    %v728 = vunpack.c.l.b16 %v622
    %v729 = vunpack.c.h.b16 %v622
    %v730 = vunpack.c.l.b16 %v623
    %v731 = vunpack.c.h.b16 %v623
    %v732 = vunpack.c.l.b16 %v624
    %v733 = vunpack.c.h.b16 %v624
    %v734 = vunpack.c.l.b16 %v625
    %v735 = vunpack.c.h.b16 %v625
    %v736 = vunpack.c.l.b16 %v626
    %v737 = vunpack.c.h.b16 %v626
    %v738 = vpack.c.b16 %v676, %v674
    %v739 = vpack.c.b16 %v677, %v675
    %v740 = vpack.c.b16 %v680, %v678
    %v741 = vpack.c.b16 %v681, %v679
    %v742 = vpack.c.b16 %v684, %v682
    %v743 = vpack.c.b16 %v685, %v683
    %v744 = vpack.c.b16 %v688, %v686
    %v745 = vpack.c.b16 %v689, %v687
    %v746 = vpack.c.b16 %v692, %v690
    %v747 = vpack.c.b16 %v693, %v691
    %v748 = vpack.c.b16 %v696, %v694
    %v749 = vpack.c.b16 %v697, %v695
    %v750 = vpack.c.b16 %v700, %v698
    %v751 = vpack.c.b16 %v701, %v699
    %v752 = vpack.c.b16 %v704, %v702
    %v753 = vpack.c.b16 %v705, %v703
    %v754 = vpack.c.b16 %v708, %v706
    %v755 = vpack.c.b16 %v709, %v707
    %v756 = vpack.c.b16 %v712, %v710
    %v757 = vpack.c.b16 %v713, %v711
    %v758 = vpack.c.b16 %v716, %v714
    %v759 = vpack.c.b16 %v717, %v715
    %v760 = vpack.c.b16 %v720, %v718
    %v761 = vpack.c.b16 %v721, %v719
    %v762 = vpack.c.b16 %v724, %v722
    %v763 = vpack.c.b16 %v725, %v723
    %v764 = vpack.c.b16 %v728, %v726
    %v765 = vpack.c.b16 %v729, %v727
    %v766 = vpack.c.b16 %v732, %v730
    %v767 = vpack.c.b16 %v733, %v731
    %v768 = vpack.c.b16 %v736, %v734
    %v769 = vpack.c.b16 %v737, %v735
    %802 = vmatpush.bf16.msra.mxu0 %v752
    %803 = vmatpush.bf16.msra.mxu0 %v750
    %804 = vmatpush.bf16.msra.mxu0 %v748
    %805 = vmatpush.bf16.msra.mxu0 %v746
    %806 = vmatpush.bf16.msra.mxu0 %v744
    %807 = vmatpush.bf16.msra.mxu0 %v742
    %808 = vmatpush.bf16.msra.mxu0 %v740
    %809 = vmatpush.bf16.msra.mxu0 %v738
    %810 = vmatmul.bf16.gmra.mxu0 %v638
    %v811 = vpop.f32.mrf.mxu0
    %v812 = vadd.f32 %v631, %v811
    %v813 = vpop.f32.mrf.mxu0
    %814 = vdwg.mxu0
    %815 = vmatpush.bf16.msra.mxu0 %v768
    %816 = vmatpush.bf16.msra.mxu0 %v766
    %817 = vmatpush.bf16.msra.mxu0 %v764
    %818 = vmatpush.bf16.msra.mxu0 %v762
    %819 = vmatpush.bf16.msra.mxu0 %v760
    %820 = vmatpush.bf16.msra.mxu0 %v758
    %821 = vmatpush.bf16.msra.mxu0 %v756
    %822 = vmatpush.bf16.msra.mxu0 %v754
    %823 = vmatmul.bf16.gmra.mxu0 %v639
    %v824 = vpop.f32.mrf.mxu0
    %v825 = vadd.f32 %v812, %v824
    %v826 = vpop.f32.mrf.mxu0
    %827 = vdwg.mxu0
    %828 = vmatpush.bf16.msra.mxu0 %v753
    %829 = vmatpush.bf16.msra.mxu0 %v751
    %830 = vmatpush.bf16.msra.mxu0 %v749
    %831 = vmatpush.bf16.msra.mxu0 %v747
    %832 = vmatpush.bf16.msra.mxu0 %v745
    %833 = vmatpush.bf16.msra.mxu0 %v743
    %834 = vmatpush.bf16.msra.mxu0 %v741
    %835 = vmatpush.bf16.msra.mxu0 %v739
    %836 = vmatmul.bf16.gmra.mxu0 %v638
    %v837 = vpop.f32.mrf.mxu0
    %v838 = vadd.f32 %v632, %v837
    %v839 = vpop.f32.mrf.mxu0
    %840 = vdwg.mxu0
    %841 = vmatpush.bf16.msra.mxu0 %v769
    %842 = vmatpush.bf16.msra.mxu0 %v767
    %843 = vmatpush.bf16.msra.mxu0 %v765
    %844 = vmatpush.bf16.msra.mxu0 %v763
    %845 = vmatpush.bf16.msra.mxu0 %v761
    %846 = vmatpush.bf16.msra.mxu0 %v759
    %847 = vmatpush.bf16.msra.mxu0 %v757
    %848 = vmatpush.bf16.msra.mxu0 %v755
    %849 = vmatmul.bf16.gmra.mxu0 %v639
    %v850 = vpop.f32.mrf.mxu0
    %v851 = vadd.f32 %v838, %v850
    %v852 = vpop.f32.mrf.mxu0
    %853 = vdwg.mxu0
    %s854 = smul.addr %s588, 8
    %s855 = scalar_lea.vmem [#allocation10], %s854
    %856 = vst [vmem:[%s855] sm:$0xff] %v825
    %857 = vst [vmem:[%s855 + $0x8] sm:$0xff] %v851
    %s858 = sadd.s32 %s586, 1
    %s859 = sld [smem:[#allocation4 + %s858]]
    %s860 = smul.u32 1, 2
    %s861 = smul.addr %s860, 4
    %s862 = scalar_lea.vmem [#allocation2], %s861
    %v863 = vld [vmem:[%s862] sm:$0xff]
    %s864 = smul.u32 %s859, 64
    %s865 = smul.addr %s864, 4
    %s866 = scalar_lea.vmem [#allocation8], %s865
    %v867 = vld [vmem:[%s866] sm:$0xff]
    %v868 = vld [vmem:[%s866 + $0x8] sm:$0xff]
    %v869 = vld [vmem:[%s866 + $0x10] sm:$0xff]
    %v870 = vld [vmem:[%s866 + $0x18] sm:$0xff]
    %v871 = vld [vmem:[%s866 + $0x20] sm:$0xff]
    %v872 = vld [vmem:[%s866 + $0x28] sm:$0xff]
    %v873 = vld [vmem:[%s866 + $0x30] sm:$0xff]
    %v874 = vld [vmem:[%s866 + $0x38] sm:$0xff]
    %v875 = vld [vmem:[%s866 + $0x40] sm:$0xff]
    %v876 = vld [vmem:[%s866 + $0x48] sm:$0xff]
    %v877 = vld [vmem:[%s866 + $0x50] sm:$0xff]
    %v878 = vld [vmem:[%s866 + $0x58] sm:$0xff]
    %v879 = vld [vmem:[%s866 + $0x60] sm:$0xff]
    %v880 = vld [vmem:[%s866 + $0x68] sm:$0xff]
    %v881 = vld [vmem:[%s866 + $0x70] sm:$0xff]
    %v882 = vld [vmem:[%s866 + $0x78] sm:$0xff]
    %v883 = vld [vmem:[%s866 + $0x80] sm:$0xff]
    %v884 = vld [vmem:[%s866 + $0x88] sm:$0xff]
    %v885 = vld [vmem:[%s866 + $0x90] sm:$0xff]
    %v886 = vld [vmem:[%s866 + $0x98] sm:$0xff]
    %v887 = vld [vmem:[%s866 + $0xa0] sm:$0xff]
    %v888 = vld [vmem:[%s866 + $0xa8] sm:$0xff]
    %v889 = vld [vmem:[%s866 + $0xb0] sm:$0xff]
    %v890 = vld [vmem:[%s866 + $0xb8] sm:$0xff]
    %v891 = vld [vmem:[%s866 + $0xc0] sm:$0xff]
    %v892 = vld [vmem:[%s866 + $0xc8] sm:$0xff]
    %v893 = vld [vmem:[%s866 + $0xd0] sm:$0xff]
    %v894 = vld [vmem:[%s866 + $0xd8] sm:$0xff]
    %v895 = vld [vmem:[%s866 + $0xe0] sm:$0xff]
    %v896 = vld [vmem:[%s866 + $0xe8] sm:$0xff]
    %v897 = vld [vmem:[%s866 + $0xf0] sm:$0xff]
    %v898 = vld [vmem:[%s866 + $0xf8] sm:$0xff]
    %s899 = smul.u32 %s859, 2
    %s900 = scalar_lea.vmem %s6, %s899
    %v901 = vld [vmem:[%s900] sm:$0x3]
    %v903 = vperm.slane %v901, 0
    %v904 = vperm.slane %v901, 1
    %v908 = vunpack.c.l.b16 %v863
    %v909 = vunpack.c.h.b16 %v863
    %v910 = vpack.c.b16 %v908, %v908
    %v911 = vpack.c.b16 %v909, %v909
    %v946 = vunpack.c.l.b16 %v867
    %v947 = vunpack.c.h.b16 %v867
    %v948 = vunpack.c.l.b16 %v868
    %v949 = vunpack.c.h.b16 %v868
    %v950 = vunpack.c.l.b16 %v869
    %v951 = vunpack.c.h.b16 %v869
    %v952 = vunpack.c.l.b16 %v870
    %v953 = vunpack.c.h.b16 %v870
    %v954 = vunpack.c.l.b16 %v871
    %v955 = vunpack.c.h.b16 %v871
    %v956 = vunpack.c.l.b16 %v872
    %v957 = vunpack.c.h.b16 %v872
    %v958 = vunpack.c.l.b16 %v873
    %v959 = vunpack.c.h.b16 %v873
    %v960 = vunpack.c.l.b16 %v874
    %v961 = vunpack.c.h.b16 %v874
    %v962 = vunpack.c.l.b16 %v875
    %v963 = vunpack.c.h.b16 %v875
    %v964 = vunpack.c.l.b16 %v876
    %v965 = vunpack.c.h.b16 %v876
    %v966 = vunpack.c.l.b16 %v877
    %v967 = vunpack.c.h.b16 %v877
    %v968 = vunpack.c.l.b16 %v878
    %v969 = vunpack.c.h.b16 %v878
    %v970 = vunpack.c.l.b16 %v879
    %v971 = vunpack.c.h.b16 %v879
    %v972 = vunpack.c.l.b16 %v880
    %v973 = vunpack.c.h.b16 %v880
    %v974 = vunpack.c.l.b16 %v881
    %v975 = vunpack.c.h.b16 %v881
    %v976 = vunpack.c.l.b16 %v882
    %v977 = vunpack.c.h.b16 %v882
    %v978 = vunpack.c.l.b16 %v883
    %v979 = vunpack.c.h.b16 %v883
    %v980 = vunpack.c.l.b16 %v884
    %v981 = vunpack.c.h.b16 %v884
    %v982 = vunpack.c.l.b16 %v885
    %v983 = vunpack.c.h.b16 %v885
    %v984 = vunpack.c.l.b16 %v886
    %v985 = vunpack.c.h.b16 %v886
    %v986 = vunpack.c.l.b16 %v887
    %v987 = vunpack.c.h.b16 %v887
    %v988 = vunpack.c.l.b16 %v888
    %v989 = vunpack.c.h.b16 %v888
    %v990 = vunpack.c.l.b16 %v889
    %v991 = vunpack.c.h.b16 %v889
    %v992 = vunpack.c.l.b16 %v890
    %v993 = vunpack.c.h.b16 %v890
    %v994 = vunpack.c.l.b16 %v891
    %v995 = vunpack.c.h.b16 %v891
    %v996 = vunpack.c.l.b16 %v892
    %v997 = vunpack.c.h.b16 %v892
    %v998 = vunpack.c.l.b16 %v893
    %v999 = vunpack.c.h.b16 %v893
    %v1000 = vunpack.c.l.b16 %v894
    %v1001 = vunpack.c.h.b16 %v894
    %v1002 = vunpack.c.l.b16 %v895
    %v1003 = vunpack.c.h.b16 %v895
    %v1004 = vunpack.c.l.b16 %v896
    %v1005 = vunpack.c.h.b16 %v896
    %v1006 = vunpack.c.l.b16 %v897
    %v1007 = vunpack.c.h.b16 %v897
    %v1008 = vunpack.c.l.b16 %v898
    %v1009 = vunpack.c.h.b16 %v898
    %v1010 = vpack.c.b16 %v948, %v946
    %v1011 = vpack.c.b16 %v949, %v947
    %v1012 = vpack.c.b16 %v952, %v950
    %v1013 = vpack.c.b16 %v953, %v951
    %v1014 = vpack.c.b16 %v956, %v954
    %v1015 = vpack.c.b16 %v957, %v955
    %v1016 = vpack.c.b16 %v960, %v958
    %v1017 = vpack.c.b16 %v961, %v959
    %v1018 = vpack.c.b16 %v964, %v962
    %v1019 = vpack.c.b16 %v965, %v963
    %v1020 = vpack.c.b16 %v968, %v966
    %v1021 = vpack.c.b16 %v969, %v967
    %v1022 = vpack.c.b16 %v972, %v970
    %v1023 = vpack.c.b16 %v973, %v971
    %v1024 = vpack.c.b16 %v976, %v974
    %v1025 = vpack.c.b16 %v977, %v975
    %v1026 = vpack.c.b16 %v980, %v978
    %v1027 = vpack.c.b16 %v981, %v979
    %v1028 = vpack.c.b16 %v984, %v982
    %v1029 = vpack.c.b16 %v985, %v983
    %v1030 = vpack.c.b16 %v988, %v986
    %v1031 = vpack.c.b16 %v989, %v987
    %v1032 = vpack.c.b16 %v992, %v990
    %v1033 = vpack.c.b16 %v993, %v991
    %v1034 = vpack.c.b16 %v996, %v994
    %v1035 = vpack.c.b16 %v997, %v995
    %v1036 = vpack.c.b16 %v1000, %v998
    %v1037 = vpack.c.b16 %v1001, %v999
    %v1038 = vpack.c.b16 %v1004, %v1002
    %v1039 = vpack.c.b16 %v1005, %v1003
    %v1040 = vpack.c.b16 %v1008, %v1006
    %v1041 = vpack.c.b16 %v1009, %v1007
    %1074 = vmatpush.bf16.msra.mxu0 %v1024
    %1075 = vmatpush.bf16.msra.mxu0 %v1022
    %1076 = vmatpush.bf16.msra.mxu0 %v1020
    %1077 = vmatpush.bf16.msra.mxu0 %v1018
    %1078 = vmatpush.bf16.msra.mxu0 %v1016
    %1079 = vmatpush.bf16.msra.mxu0 %v1014
    %1080 = vmatpush.bf16.msra.mxu0 %v1012
    %1081 = vmatpush.bf16.msra.mxu0 %v1010
    %1082 = vmatmul.bf16.gmra.mxu0 %v910
    %v1083 = vpop.f32.mrf.mxu0
    %v1084 = vadd.f32 %v903, %v1083
    %v1085 = vpop.f32.mrf.mxu0
    %1086 = vdwg.mxu0
    %1087 = vmatpush.bf16.msra.mxu0 %v1040
    %1088 = vmatpush.bf16.msra.mxu0 %v1038
    %1089 = vmatpush.bf16.msra.mxu0 %v1036
    %1090 = vmatpush.bf16.msra.mxu0 %v1034
    %1091 = vmatpush.bf16.msra.mxu0 %v1032
    %1092 = vmatpush.bf16.msra.mxu0 %v1030
    %1093 = vmatpush.bf16.msra.mxu0 %v1028
    %1094 = vmatpush.bf16.msra.mxu0 %v1026
    %1095 = vmatmul.bf16.gmra.mxu0 %v911
    %v1096 = vpop.f32.mrf.mxu0
    %v1097 = vadd.f32 %v1084, %v1096
    %v1098 = vpop.f32.mrf.mxu0
    %1099 = vdwg.mxu0
    %1100 = vmatpush.bf16.msra.mxu0 %v1025
    %1101 = vmatpush.bf16.msra.mxu0 %v1023
    %1102 = vmatpush.bf16.msra.mxu0 %v1021
    %1103 = vmatpush.bf16.msra.mxu0 %v1019
    %1104 = vmatpush.bf16.msra.mxu0 %v1017
    %1105 = vmatpush.bf16.msra.mxu0 %v1015
    %1106 = vmatpush.bf16.msra.mxu0 %v1013
    %1107 = vmatpush.bf16.msra.mxu0 %v1011
    %1108 = vmatmul.bf16.gmra.mxu0 %v910
    %v1109 = vpop.f32.mrf.mxu0
    %v1110 = vadd.f32 %v904, %v1109
    %v1111 = vpop.f32.mrf.mxu0
    %1112 = vdwg.mxu0
    %1113 = vmatpush.bf16.msra.mxu0 %v1041
    %1114 = vmatpush.bf16.msra.mxu0 %v1039
    %1115 = vmatpush.bf16.msra.mxu0 %v1037
    %1116 = vmatpush.bf16.msra.mxu0 %v1035
    %1117 = vmatpush.bf16.msra.mxu0 %v1033
    %1118 = vmatpush.bf16.msra.mxu0 %v1031
    %1119 = vmatpush.bf16.msra.mxu0 %v1029
    %1120 = vmatpush.bf16.msra.mxu0 %v1027
    %1121 = vmatmul.bf16.gmra.mxu0 %v911
    %v1122 = vpop.f32.mrf.mxu0
    %v1123 = vadd.f32 %v1110, %v1122
    %v1124 = vpop.f32.mrf.mxu0
    %1125 = vdwg.mxu0
    %s1126 = smul.addr %s860, 8
    %s1127 = scalar_lea.vmem [#allocation10], %s1126
    %1128 = vst [vmem:[%s1127] sm:$0xff] %v1097
    %1129 = vst [vmem:[%s1127 + $0x8] sm:$0xff] %v1123
    %s1130 = sadd.s32 %s586, 2
    %s1131 = sld [smem:[#allocation4 + %s1130]]
    %s1132 = smul.u32 2, 2
    %s1133 = smul.addr %s1132, 4
    %s1134 = scalar_lea.vmem [#allocation2], %s1133
    %v1135 = vld [vmem:[%s1134] sm:$0xff]
    %s1136 = smul.u32 %s1131, 64
    %s1137 = smul.addr %s1136, 4
    %s1138 = scalar_lea.vmem [#allocation8], %s1137
    %v1139 = vld [vmem:[%s1138] sm:$0xff]
    %v1140 = vld [vmem:[%s1138 + $0x8] sm:$0xff]
    %v1141 = vld [vmem:[%s1138 + $0x10] sm:$0xff]
    %v1142 = vld [vmem:[%s1138 + $0x18] sm:$0xff]
    %v1143 = vld [vmem:[%s1138 + $0x20] sm:$0xff]
    %v1144 = vld [vmem:[%s1138 + $0x28] sm:$0xff]
    %v1145 = vld [vmem:[%s1138 + $0x30] sm:$0xff]
    %v1146 = vld [vmem:[%s1138 + $0x38] sm:$0xff]
    %v1147 = vld [vmem:[%s1138 + $0x40] sm:$0xff]
    %v1148 = vld [vmem:[%s1138 + $0x48] sm:$0xff]
    %v1149 = vld [vmem:[%s1138 + $0x50] sm:$0xff]
    %v1150 = vld [vmem:[%s1138 + $0x58] sm:$0xff]
    %v1151 = vld [vmem:[%s1138 + $0x60] sm:$0xff]
    %v1152 = vld [vmem:[%s1138 + $0x68] sm:$0xff]
    %v1153 = vld [vmem:[%s1138 + $0x70] sm:$0xff]
    %v1154 = vld [vmem:[%s1138 + $0x78] sm:$0xff]
    %v1155 = vld [vmem:[%s1138 + $0x80] sm:$0xff]
    %v1156 = vld [vmem:[%s1138 + $0x88] sm:$0xff]
    %v1157 = vld [vmem:[%s1138 + $0x90] sm:$0xff]
    %v1158 = vld [vmem:[%s1138 + $0x98] sm:$0xff]
    %v1159 = vld [vmem:[%s1138 + $0xa0] sm:$0xff]
    %v1160 = vld [vmem:[%s1138 + $0xa8] sm:$0xff]
    %v1161 = vld [vmem:[%s1138 + $0xb0] sm:$0xff]
    %v1162 = vld [vmem:[%s1138 + $0xb8] sm:$0xff]
    %v1163 = vld [vmem:[%s1138 + $0xc0] sm:$0xff]
    %v1164 = vld [vmem:[%s1138 + $0xc8] sm:$0xff]
    %v1165 = vld [vmem:[%s1138 + $0xd0] sm:$0xff]
    %v1166 = vld [vmem:[%s1138 + $0xd8] sm:$0xff]
    %v1167 = vld [vmem:[%s1138 + $0xe0] sm:$0xff]
    %v1168 = vld [vmem:[%s1138 + $0xe8] sm:$0xff]
    %v1169 = vld [vmem:[%s1138 + $0xf0] sm:$0xff]
    %v1170 = vld [vmem:[%s1138 + $0xf8] sm:$0xff]
    %s1171 = smul.u32 %s1131, 2
    %s1172 = scalar_lea.vmem %s6, %s1171
    %v1173 = vld [vmem:[%s1172] sm:$0x3]
    %v1175 = vperm.slane %v1173, 0
    %v1176 = vperm.slane %v1173, 1
    %v1180 = vunpack.c.l.b16 %v1135
    %v1181 = vunpack.c.h.b16 %v1135
    %v1182 = vpack.c.b16 %v1180, %v1180
    %v1183 = vpack.c.b16 %v1181, %v1181
    %v1218 = vunpack.c.l.b16 %v1139
    %v1219 = vunpack.c.h.b16 %v1139
    %v1220 = vunpack.c.l.b16 %v1140
    %v1221 = vunpack.c.h.b16 %v1140
    %v1222 = vunpack.c.l.b16 %v1141
    %v1223 = vunpack.c.h.b16 %v1141
    %v1224 = vunpack.c.l.b16 %v1142
    %v1225 = vunpack.c.h.b16 %v1142
    %v1226 = vunpack.c.l.b16 %v1143
    %v1227 = vunpack.c.h.b16 %v1143
    %v1228 = vunpack.c.l.b16 %v1144
    %v1229 = vunpack.c.h.b16 %v1144
    %v1230 = vunpack.c.l.b16 %v1145
    %v1231 = vunpack.c.h.b16 %v1145
    %v1232 = vunpack.c.l.b16 %v1146
    %v1233 = vunpack.c.h.b16 %v1146
    %v1234 = vunpack.c.l.b16 %v1147
    %v1235 = vunpack.c.h.b16 %v1147
    %v1236 = vunpack.c.l.b16 %v1148
    %v1237 = vunpack.c.h.b16 %v1148
    %v1238 = vunpack.c.l.b16 %v1149
    %v1239 = vunpack.c.h.b16 %v1149
    %v1240 = vunpack.c.l.b16 %v1150
    %v1241 = vunpack.c.h.b16 %v1150
    %v1242 = vunpack.c.l.b16 %v1151
    %v1243 = vunpack.c.h.b16 %v1151
    %v1244 = vunpack.c.l.b16 %v1152
    %v1245 = vunpack.c.h.b16 %v1152
    %v1246 = vunpack.c.l.b16 %v1153
    %v1247 = vunpack.c.h.b16 %v1153
    %v1248 = vunpack.c.l.b16 %v1154
    %v1249 = vunpack.c.h.b16 %v1154
    %v1250 = vunpack.c.l.b16 %v1155
    %v1251 = vunpack.c.h.b16 %v1155
    %v1252 = vunpack.c.l.b16 %v1156
    %v1253 = vunpack.c.h.b16 %v1156
    %v1254 = vunpack.c.l.b16 %v1157
    %v1255 = vunpack.c.h.b16 %v1157
    %v1256 = vunpack.c.l.b16 %v1158
    %v1257 = vunpack.c.h.b16 %v1158
    %v1258 = vunpack.c.l.b16 %v1159
    %v1259 = vunpack.c.h.b16 %v1159
    %v1260 = vunpack.c.l.b16 %v1160
    %v1261 = vunpack.c.h.b16 %v1160
    %v1262 = vunpack.c.l.b16 %v1161
    %v1263 = vunpack.c.h.b16 %v1161
    %v1264 = vunpack.c.l.b16 %v1162
    %v1265 = vunpack.c.h.b16 %v1162
    %v1266 = vunpack.c.l.b16 %v1163
    %v1267 = vunpack.c.h.b16 %v1163
    %v1268 = vunpack.c.l.b16 %v1164
    %v1269 = vunpack.c.h.b16 %v1164
    %v1270 = vunpack.c.l.b16 %v1165
    %v1271 = vunpack.c.h.b16 %v1165
    %v1272 = vunpack.c.l.b16 %v1166
    %v1273 = vunpack.c.h.b16 %v1166
    %v1274 = vunpack.c.l.b16 %v1167
    %v1275 = vunpack.c.h.b16 %v1167
    %v1276 = vunpack.c.l.b16 %v1168
    %v1277 = vunpack.c.h.b16 %v1168
    %v1278 = vunpack.c.l.b16 %v1169
    %v1279 = vunpack.c.h.b16 %v1169
    %v1280 = vunpack.c.l.b16 %v1170
    %v1281 = vunpack.c.h.b16 %v1170
    %v1282 = vpack.c.b16 %v1220, %v1218
    %v1283 = vpack.c.b16 %v1221, %v1219
    %v1284 = vpack.c.b16 %v1224, %v1222
    %v1285 = vpack.c.b16 %v1225, %v1223
    %v1286 = vpack.c.b16 %v1228, %v1226
    %v1287 = vpack.c.b16 %v1229, %v1227
    %v1288 = vpack.c.b16 %v1232, %v1230
    %v1289 = vpack.c.b16 %v1233, %v1231
    %v1290 = vpack.c.b16 %v1236, %v1234
    %v1291 = vpack.c.b16 %v1237, %v1235
    %v1292 = vpack.c.b16 %v1240, %v1238
    %v1293 = vpack.c.b16 %v1241, %v1239
    %v1294 = vpack.c.b16 %v1244, %v1242
    %v1295 = vpack.c.b16 %v1245, %v1243
    %v1296 = vpack.c.b16 %v1248, %v1246
    %v1297 = vpack.c.b16 %v1249, %v1247
    %v1298 = vpack.c.b16 %v1252, %v1250
    %v1299 = vpack.c.b16 %v1253, %v1251
    %v1300 = vpack.c.b16 %v1256, %v1254
    %v1301 = vpack.c.b16 %v1257, %v1255
    %v1302 = vpack.c.b16 %v1260, %v1258
    %v1303 = vpack.c.b16 %v1261, %v1259
    %v1304 = vpack.c.b16 %v1264, %v1262
    %v1305 = vpack.c.b16 %v1265, %v1263
    %v1306 = vpack.c.b16 %v1268, %v1266
    %v1307 = vpack.c.b16 %v1269, %v1267
    %v1308 = vpack.c.b16 %v1272, %v1270
    %v1309 = vpack.c.b16 %v1273, %v1271
    %v1310 = vpack.c.b16 %v1276, %v1274
    %v1311 = vpack.c.b16 %v1277, %v1275
    %v1312 = vpack.c.b16 %v1280, %v1278
    %v1313 = vpack.c.b16 %v1281, %v1279
    %1346 = vmatpush.bf16.msra.mxu0 %v1296
    %1347 = vmatpush.bf16.msra.mxu0 %v1294
    %1348 = vmatpush.bf16.msra.mxu0 %v1292
    %1349 = vmatpush.bf16.msra.mxu0 %v1290
    %1350 = vmatpush.bf16.msra.mxu0 %v1288
    %1351 = vmatpush.bf16.msra.mxu0 %v1286
    %1352 = vmatpush.bf16.msra.mxu0 %v1284
    %1353 = vmatpush.bf16.msra.mxu0 %v1282
    %1354 = vmatmul.bf16.gmra.mxu0 %v1182
    %v1355 = vpop.f32.mrf.mxu0
    %v1356 = vadd.f32 %v1175, %v1355
    %v1357 = vpop.f32.mrf.mxu0
    %1358 = vdwg.mxu0
    %1359 = vmatpush.bf16.msra.mxu0 %v1312
    %1360 = vmatpush.bf16.msra.mxu0 %v1310
    %1361 = vmatpush.bf16.msra.mxu0 %v1308
    %1362 = vmatpush.bf16.msra.mxu0 %v1306
    %1363 = vmatpush.bf16.msra.mxu0 %v1304
    %1364 = vmatpush.bf16.msra.mxu0 %v1302
    %1365 = vmatpush.bf16.msra.mxu0 %v1300
    %1366 = vmatpush.bf16.msra.mxu0 %v1298
    %1367 = vmatmul.bf16.gmra.mxu0 %v1183
    %v1368 = vpop.f32.mrf.mxu0
    %v1369 = vadd.f32 %v1356, %v1368
    %v1370 = vpop.f32.mrf.mxu0
    %1371 = vdwg.mxu0
    %1372 = vmatpush.bf16.msra.mxu0 %v1297
    %1373 = vmatpush.bf16.msra.mxu0 %v1295
    %1374 = vmatpush.bf16.msra.mxu0 %v1293
    %1375 = vmatpush.bf16.msra.mxu0 %v1291
    %1376 = vmatpush.bf16.msra.mxu0 %v1289
    %1377 = vmatpush.bf16.msra.mxu0 %v1287
    %1378 = vmatpush.bf16.msra.mxu0 %v1285
    %1379 = vmatpush.bf16.msra.mxu0 %v1283
    %1380 = vmatmul.bf16.gmra.mxu0 %v1182
    %v1381 = vpop.f32.mrf.mxu0
    %v1382 = vadd.f32 %v1176, %v1381
    %v1383 = vpop.f32.mrf.mxu0
    %1384 = vdwg.mxu0
    %1385 = vmatpush.bf16.msra.mxu0 %v1313
    %1386 = vmatpush.bf16.msra.mxu0 %v1311
    %1387 = vmatpush.bf16.msra.mxu0 %v1309
    %1388 = vmatpush.bf16.msra.mxu0 %v1307
    %1389 = vmatpush.bf16.msra.mxu0 %v1305
    %1390 = vmatpush.bf16.msra.mxu0 %v1303
    %1391 = vmatpush.bf16.msra.mxu0 %v1301
    %1392 = vmatpush.bf16.msra.mxu0 %v1299
    %1393 = vmatmul.bf16.gmra.mxu0 %v1183
    %v1394 = vpop.f32.mrf.mxu0
    %v1395 = vadd.f32 %v1382, %v1394
    %v1396 = vpop.f32.mrf.mxu0
    %1397 = vdwg.mxu0
    %s1398 = smul.addr %s1132, 8
    %s1399 = scalar_lea.vmem [#allocation10], %s1398
    %1400 = vst [vmem:[%s1399] sm:$0xff] %v1369
    %1401 = vst [vmem:[%s1399 + $0x8] sm:$0xff] %v1395
    %s1402 = sadd.s32 %s586, 3
    %s1403 = sld [smem:[#allocation4 + %s1402]]
    %s1404 = smul.u32 3, 2
    %s1405 = smul.addr %s1404, 4
    %s1406 = scalar_lea.vmem [#allocation2], %s1405
    %v1407 = vld [vmem:[%s1406] sm:$0xff]
    %s1408 = smul.u32 %s1403, 64
    %s1409 = smul.addr %s1408, 4
    %s1410 = scalar_lea.vmem [#allocation8], %s1409
    %v1411 = vld [vmem:[%s1410] sm:$0xff]
    %v1412 = vld [vmem:[%s1410 + $0x8] sm:$0xff]
    %v1413 = vld [vmem:[%s1410 + $0x10] sm:$0xff]
    %v1414 = vld [vmem:[%s1410 + $0x18] sm:$0xff]
    %v1415 = vld [vmem:[%s1410 + $0x20] sm:$0xff]
    %v1416 = vld [vmem:[%s1410 + $0x28] sm:$0xff]
    %v1417 = vld [vmem:[%s1410 + $0x30] sm:$0xff]
    %v1418 = vld [vmem:[%s1410 + $0x38] sm:$0xff]
    %v1419 = vld [vmem:[%s1410 + $0x40] sm:$0xff]
    %v1420 = vld [vmem:[%s1410 + $0x48] sm:$0xff]
    %v1421 = vld [vmem:[%s1410 + $0x50] sm:$0xff]
    %v1422 = vld [vmem:[%s1410 + $0x58] sm:$0xff]
    %v1423 = vld [vmem:[%s1410 + $0x60] sm:$0xff]
    %v1424 = vld [vmem:[%s1410 + $0x68] sm:$0xff]
    %v1425 = vld [vmem:[%s1410 + $0x70] sm:$0xff]
    %v1426 = vld [vmem:[%s1410 + $0x78] sm:$0xff]
    %v1427 = vld [vmem:[%s1410 + $0x80] sm:$0xff]
    %v1428 = vld [vmem:[%s1410 + $0x88] sm:$0xff]
    %v1429 = vld [vmem:[%s1410 + $0x90] sm:$0xff]
    %v1430 = vld [vmem:[%s1410 + $0x98] sm:$0xff]
    %v1431 = vld [vmem:[%s1410 + $0xa0] sm:$0xff]
    %v1432 = vld [vmem:[%s1410 + $0xa8] sm:$0xff]
    %v1433 = vld [vmem:[%s1410 + $0xb0] sm:$0xff]
    %v1434 = vld [vmem:[%s1410 + $0xb8] sm:$0xff]
    %v1435 = vld [vmem:[%s1410 + $0xc0] sm:$0xff]
    %v1436 = vld [vmem:[%s1410 + $0xc8] sm:$0xff]
    %v1437 = vld [vmem:[%s1410 + $0xd0] sm:$0xff]
    %v1438 = vld [vmem:[%s1410 + $0xd8] sm:$0xff]
    %v1439 = vld [vmem:[%s1410 + $0xe0] sm:$0xff]
    %v1440 = vld [vmem:[%s1410 + $0xe8] sm:$0xff]
    %v1441 = vld [vmem:[%s1410 + $0xf0] sm:$0xff]
    %v1442 = vld [vmem:[%s1410 + $0xf8] sm:$0xff]
    %s1443 = smul.u32 %s1403, 2
    %s1444 = scalar_lea.vmem %s6, %s1443
    %v1445 = vld [vmem:[%s1444] sm:$0x3]
    %v1447 = vperm.slane %v1445, 0
    %v1448 = vperm.slane %v1445, 1
    %v1452 = vunpack.c.l.b16 %v1407
    %v1453 = vunpack.c.h.b16 %v1407
    %v1454 = vpack.c.b16 %v1452, %v1452
    %v1455 = vpack.c.b16 %v1453, %v1453
    %v1490 = vunpack.c.l.b16 %v1411
    %v1491 = vunpack.c.h.b16 %v1411
    %v1492 = vunpack.c.l.b16 %v1412
    %v1493 = vunpack.c.h.b16 %v1412
    %v1494 = vunpack.c.l.b16 %v1413
    %v1495 = vunpack.c.h.b16 %v1413
    %v1496 = vunpack.c.l.b16 %v1414
    %v1497 = vunpack.c.h.b16 %v1414
    %v1498 = vunpack.c.l.b16 %v1415
    %v1499 = vunpack.c.h.b16 %v1415
    %v1500 = vunpack.c.l.b16 %v1416
    %v1501 = vunpack.c.h.b16 %v1416
    %v1502 = vunpack.c.l.b16 %v1417
    %v1503 = vunpack.c.h.b16 %v1417
    %v1504 = vunpack.c.l.b16 %v1418
    %v1505 = vunpack.c.h.b16 %v1418
    %v1506 = vunpack.c.l.b16 %v1419
    %v1507 = vunpack.c.h.b16 %v1419
    %v1508 = vunpack.c.l.b16 %v1420
    %v1509 = vunpack.c.h.b16 %v1420
    %v1510 = vunpack.c.l.b16 %v1421
    %v1511 = vunpack.c.h.b16 %v1421
    %v1512 = vunpack.c.l.b16 %v1422
    %v1513 = vunpack.c.h.b16 %v1422
    %v1514 = vunpack.c.l.b16 %v1423
    %v1515 = vunpack.c.h.b16 %v1423
    %v1516 = vunpack.c.l.b16 %v1424
    %v1517 = vunpack.c.h.b16 %v1424
    %v1518 = vunpack.c.l.b16 %v1425
    %v1519 = vunpack.c.h.b16 %v1425
    %v1520 = vunpack.c.l.b16 %v1426
    %v1521 = vunpack.c.h.b16 %v1426
    %v1522 = vunpack.c.l.b16 %v1427
    %v1523 = vunpack.c.h.b16 %v1427
    %v1524 = vunpack.c.l.b16 %v1428
    %v1525 = vunpack.c.h.b16 %v1428
    %v1526 = vunpack.c.l.b16 %v1429
    %v1527 = vunpack.c.h.b16 %v1429
    %v1528 = vunpack.c.l.b16 %v1430
    %v1529 = vunpack.c.h.b16 %v1430
    %v1530 = vunpack.c.l.b16 %v1431
    %v1531 = vunpack.c.h.b16 %v1431
    %v1532 = vunpack.c.l.b16 %v1432
    %v1533 = vunpack.c.h.b16 %v1432
    %v1534 = vunpack.c.l.b16 %v1433
    %v1535 = vunpack.c.h.b16 %v1433
    %v1536 = vunpack.c.l.b16 %v1434
    %v1537 = vunpack.c.h.b16 %v1434
    %v1538 = vunpack.c.l.b16 %v1435
    %v1539 = vunpack.c.h.b16 %v1435
    %v1540 = vunpack.c.l.b16 %v1436
    %v1541 = vunpack.c.h.b16 %v1436
    %v1542 = vunpack.c.l.b16 %v1437
    %v1543 = vunpack.c.h.b16 %v1437
    %v1544 = vunpack.c.l.b16 %v1438
    %v1545 = vunpack.c.h.b16 %v1438
    %v1546 = vunpack.c.l.b16 %v1439
    %v1547 = vunpack.c.h.b16 %v1439
    %v1548 = vunpack.c.l.b16 %v1440
    %v1549 = vunpack.c.h.b16 %v1440
    %v1550 = vunpack.c.l.b16 %v1441
    %v1551 = vunpack.c.h.b16 %v1441
    %v1552 = vunpack.c.l.b16 %v1442
    %v1553 = vunpack.c.h.b16 %v1442
    %v1554 = vpack.c.b16 %v1492, %v1490
    %v1555 = vpack.c.b16 %v1493, %v1491
    %v1556 = vpack.c.b16 %v1496, %v1494
    %v1557 = vpack.c.b16 %v1497, %v1495
    %v1558 = vpack.c.b16 %v1500, %v1498
    %v1559 = vpack.c.b16 %v1501, %v1499
    %v1560 = vpack.c.b16 %v1504, %v1502
    %v1561 = vpack.c.b16 %v1505, %v1503
    %v1562 = vpack.c.b16 %v1508, %v1506
    %v1563 = vpack.c.b16 %v1509, %v1507
    %v1564 = vpack.c.b16 %v1512, %v1510
    %v1565 = vpack.c.b16 %v1513, %v1511
    %v1566 = vpack.c.b16 %v1516, %v1514
    %v1567 = vpack.c.b16 %v1517, %v1515
    %v1568 = vpack.c.b16 %v1520, %v1518
    %v1569 = vpack.c.b16 %v1521, %v1519
    %v1570 = vpack.c.b16 %v1524, %v1522
    %v1571 = vpack.c.b16 %v1525, %v1523
    %v1572 = vpack.c.b16 %v1528, %v1526
    %v1573 = vpack.c.b16 %v1529, %v1527
    %v1574 = vpack.c.b16 %v1532, %v1530
    %v1575 = vpack.c.b16 %v1533, %v1531
    %v1576 = vpack.c.b16 %v1536, %v1534
    %v1577 = vpack.c.b16 %v1537, %v1535
    %v1578 = vpack.c.b16 %v1540, %v1538
    %v1579 = vpack.c.b16 %v1541, %v1539
    %v1580 = vpack.c.b16 %v1544, %v1542
    %v1581 = vpack.c.b16 %v1545, %v1543
    %v1582 = vpack.c.b16 %v1548, %v1546
    %v1583 = vpack.c.b16 %v1549, %v1547
    %v1584 = vpack.c.b16 %v1552, %v1550
    %v1585 = vpack.c.b16 %v1553, %v1551
    %1618 = vmatpush.bf16.msra.mxu0 %v1568
    %1619 = vmatpush.bf16.msra.mxu0 %v1566
    %1620 = vmatpush.bf16.msra.mxu0 %v1564
    %1621 = vmatpush.bf16.msra.mxu0 %v1562
    %1622 = vmatpush.bf16.msra.mxu0 %v1560
    %1623 = vmatpush.bf16.msra.mxu0 %v1558
    %1624 = vmatpush.bf16.msra.mxu0 %v1556
    %1625 = vmatpush.bf16.msra.mxu0 %v1554
    %1626 = vmatmul.bf16.gmra.mxu0 %v1454
    %v1627 = vpop.f32.mrf.mxu0
    %v1628 = vadd.f32 %v1447, %v1627
    %v1629 = vpop.f32.mrf.mxu0
    %1630 = vdwg.mxu0
    %1631 = vmatpush.bf16.msra.mxu0 %v1584
    %1632 = vmatpush.bf16.msra.mxu0 %v1582
    %1633 = vmatpush.bf16.msra.mxu0 %v1580
    %1634 = vmatpush.bf16.msra.mxu0 %v1578
    %1635 = vmatpush.bf16.msra.mxu0 %v1576
    %1636 = vmatpush.bf16.msra.mxu0 %v1574
    %1637 = vmatpush.bf16.msra.mxu0 %v1572
    %1638 = vmatpush.bf16.msra.mxu0 %v1570
    %1639 = vmatmul.bf16.gmra.mxu0 %v1455
    %v1640 = vpop.f32.mrf.mxu0
    %v1641 = vadd.f32 %v1628, %v1640
    %v1642 = vpop.f32.mrf.mxu0
    %1643 = vdwg.mxu0
    %1644 = vmatpush.bf16.msra.mxu0 %v1569
    %1645 = vmatpush.bf16.msra.mxu0 %v1567
    %1646 = vmatpush.bf16.msra.mxu0 %v1565
    %1647 = vmatpush.bf16.msra.mxu0 %v1563
    %1648 = vmatpush.bf16.msra.mxu0 %v1561
    %1649 = vmatpush.bf16.msra.mxu0 %v1559
    %1650 = vmatpush.bf16.msra.mxu0 %v1557
    %1651 = vmatpush.bf16.msra.mxu0 %v1555
    %1652 = vmatmul.bf16.gmra.mxu0 %v1454
    %v1653 = vpop.f32.mrf.mxu0
    %v1654 = vadd.f32 %v1448, %v1653
    %v1655 = vpop.f32.mrf.mxu0
    %1656 = vdwg.mxu0
    %1657 = vmatpush.bf16.msra.mxu0 %v1585
    %1658 = vmatpush.bf16.msra.mxu0 %v1583
    %1659 = vmatpush.bf16.msra.mxu0 %v1581
    %1660 = vmatpush.bf16.msra.mxu0 %v1579
    %1661 = vmatpush.bf16.msra.mxu0 %v1577
    %1662 = vmatpush.bf16.msra.mxu0 %v1575
    %1663 = vmatpush.bf16.msra.mxu0 %v1573
    %1664 = vmatpush.bf16.msra.mxu0 %v1571
    %1665 = vmatmul.bf16.gmra.mxu0 %v1455
    %v1666 = vpop.f32.mrf.mxu0
    %v1667 = vadd.f32 %v1654, %v1666
    %v1668 = vpop.f32.mrf.mxu0
    %1669 = vdwg.mxu0
    %s1670 = smul.addr %s1404, 8
    %s1671 = scalar_lea.vmem [#allocation10], %s1670
    %1672 = vst [vmem:[%s1671] sm:$0xff] %v1641
    %1673 = vst [vmem:[%s1671 + $0x8] sm:$0xff] %v1667
    // Predicated region
    $region34: #{tpu_custom_call.1} parent=1 // pred_check
      _
    $region35: #{tpu_custom_call.1} parent=1 // pred_check_branch
      %1675 = sbr.rel (0) target = $region37
    $region36: #{tpu_custom_call.1} parent=1 // pred_region
      %1677 = vsyncadd [#allocation7], 0
      %s1678 = sshll.u32 [#allocation10], 4
      %s1679 = int_to_ptr.vmem [resolvable:$true] %s1678
      %s1680 = sshll.u32 %s7, 4
      %s1681 = int_to_ptr.hbm [resolvable:$true] %s1680
      %1686 = dma.vmem_to_hbm [thread:$0]  %s1679, 1024, %s1681, [#allocation7], 256, 256, 16
    $region37: #{tpu_custom_call.1} parent=1 // pred_fallthru
      _
    // Predicated region
    $region38: #{tpu_custom_call.1} parent=1 // pred_check
      _
    $region39: #{tpu_custom_call.1} parent=1 // pred_check_branch
      %1688 = sbr.rel (0) target = $region41
    $region40: #{tpu_custom_call.1} parent=1 // pred_region
      %1690 = dma.done [#allocation7], 1024
    $region41: #{tpu_custom_call.1} parent=1 // pred_fallthru
      _
    %1691 = vsyncpa [#allocation6], 1
    %1692 = vsyncpa [#allocation9], 1
    %1693 = vsyncpa [#allocation7], 1

</llo_original>
